<compile_context>
chip_gen: v5e
topology: v5e:2x2
jax: 0.10.0
libtpu: 0.0.40
codegen_flags: <defaults>
</compile_context>

<pallas_src>
import jax
import jax.numpy as jnp
from jax.experimental import pallas as pl
from jax.experimental.pallas import tpu as pltpu

C_IN = 448
C_OUT = 1792
H = W_SP = 7
TN = 896  # output-channel tile -> 2 grid steps (good for v7x megacore, harmless on v5e/v6e)


def conv1x1_kernel(x_ref, w_ref, o_ref):
    # x_ref: [C_in, H*W] (resident across steps)
    # w_ref: [TN, C_in]  slab of output channels (native [C_out, C_in] layout, no transpose)
    # o_ref: [TN, H*W]
    o_ref[...] = jnp.dot(
        w_ref[...], x_ref[...], preferred_element_type=jnp.float32
    ).astype(o_ref.dtype)


def conv2d_1x1(x_nchw: jax.Array, weight_oihw: jax.Array) -> jax.Array:
    """1x1 conv, stride 1, no bias.  x_nchw: [N, C_in, H, W], weight: [C_out, C_in, 1, 1]."""
    n, c_in, h, w = x_nchw.shape
    c_out = weight_oihw.shape[0]
    hw = h * w

    # Free reshapes only -- no transposes, no padding.
    x3d = x_nchw.reshape(n, c_in, hw)          # [N, C_in, H*W]
    w2d = weight_oihw.reshape(c_out, c_in)     # [C_out, C_in] (native torch layout)

    tn = TN if (c_out % TN == 0) else c_out
    grid = (n, c_out // tn)

    itemsize = jnp.dtype(x_nchw.dtype).itemsize
    cost = pl.CostEstimate(
        flops=2 * n * hw * c_in * c_out,
        transcendentals=0,
        bytes_accessed=(x3d.size + w2d.size + n * c_out * hw) * itemsize,
    )

    out3d = pl.pallas_call(
        conv1x1_kernel,
        out_shape=jax.ShapeDtypeStruct((n, c_out, hw), x_nchw.dtype),
        grid_spec=pltpu.PrefetchScalarGridSpec(
            num_scalar_prefetch=0,
            grid=grid,
            in_specs=[
                # X: one batch element, full [C_in, H*W], resident every channel-tile step.
                pl.BlockSpec((None, c_in, hw), lambda b, j: (b, 0, 0)),
                # W: [TN, C_in] slab per step, consumed in native [C_out, C_in] layout.
                pl.BlockSpec((tn, c_in), lambda b, j: (j, 0)),
            ],
            out_specs=pl.BlockSpec((None, tn, hw), lambda b, j: (b, j, 0)),
        ),
        compiler_params=pltpu.CompilerParams(
            dimension_semantics=("parallel", "parallel"),
        ),
        cost_estimate=cost,
    )(x3d, w2d)

    # Free reshape back to NCHW.
    return out3d.reshape(n, c_out, h, w)


if __name__ == "__main__":
    key = jax.random.PRNGKey(0)
    kx, kw = jax.random.split(key)

    # Input matching the module's forward: [1, 448, 7, 7]
    x495 = jax.random.normal(kx, (1, C_IN, H, W_SP), dtype=jnp.float32)
    # Deterministic conv weight: [1792, 448, 1, 1] (Kaiming-ish scale)
    weight = jax.random.normal(kw, (C_OUT, C_IN, 1, 1), dtype=jnp.float32) * (
        1.0 / jnp.sqrt(C_IN)
    )

    out = conv2d_1x1(x495, weight)
    out = jax.block_until_ready(out)

    # Sanity check against plain-JAX reference (1x1 conv == matmul over channels).
    ref = jnp.einsum("nchw,oc->nohw", x495, weight.reshape(C_OUT, C_IN))
    assert out.shape == (1, C_OUT, H, W_SP), out.shape
    assert jnp.allclose(out, ref, atol=1e-4, rtol=1e-4), "mismatch vs reference"

    print("KERNEL_OK")
</pallas_src>

<mosaic_0001>
module attributes {stable_mosaic.version = 11 : i64} {
  func.func @conv1x1_kernel(%arg0: i32, %arg1: i32, %arg2: memref<1x448x49xf32, #tpu.memory_space<vmem>>, %arg3: memref<896x448xf32, #tpu.memory_space<vmem>>, %arg4: memref<1x896x49xf32, #tpu.memory_space<vmem>>) attributes {dimension_semantics = [#tpu.dimension_semantics<parallel>, #tpu.dimension_semantics<parallel>], iteration_bounds = array<i64: 1, 2>, scalar_prefetch = 0 : i64, scratch_operands = 0 : i64, tpu.core_type = #tpu.core_type<tc>, window_params = [{transform_indices = @transform_0, window_bounds = array<i64: 1, 448, 49>}, {transform_indices = @transform_1, window_bounds = array<i64: 896, 448>}, {transform_indices = @transform_2, window_bounds = array<i64: 1, 896, 49>}]} {
    %c0 = arith.constant 0 : index
    %c0_0 = arith.constant 0 : index
    %0 = vector.load %arg3[%c0, %c0_0] : memref<896x448xf32, #tpu.memory_space<vmem>>, vector<896x448xf32>
    %c0_1 = arith.constant 0 : index
    %c0_2 = arith.constant 0 : index
    %c0_3 = arith.constant 0 : index
    %1 = vector.load %arg2[%c0_1, %c0_2, %c0_3] : memref<1x448x49xf32, #tpu.memory_space<vmem>>, vector<1x448x49xf32>
    %2 = vector.shape_cast %1 : vector<1x448x49xf32> to vector<448x49xf32>
    %cst = arith.constant dense<0.000000e+00> : vector<896x49xf32>
    %3 = tpu.matmul %0, %2, %cst {dimension_numbers = #tpu.dot_dimension_numbers<[1], [0], [0], [1], [0, 0, 1, 1], [], []>} : vector<896x448xf32>, vector<448x49xf32>, vector<896x49xf32> -> vector<896x49xf32>
    %c0_4 = arith.constant 0 : index
    %c0_5 = arith.constant 0 : index
    %c0_6 = arith.constant 0 : index
    %4 = vector.load %arg4[%c0_4, %c0_5, %c0_6] : memref<1x896x49xf32, #tpu.memory_space<vmem>>, vector<1x896x49xf32>
    %5 = vector.shape_cast %4 : vector<1x896x49xf32> to vector<896x49xf32>
    %6 = vector.shape_cast %3 : vector<896x49xf32> to vector<1x896x49xf32>
    tpu.vector_store %arg4[%c0_4, %c0_5, %c0_6], %6 {strides = array<i32>} : memref<1x896x49xf32, #tpu.memory_space<vmem>>, vector<1x896x49xf32>,
    return
  }
  func.func @transform_0(%arg0: i32, %arg1: i32) -> (i32, i32, i32) {
    %c0_i32 = arith.constant 0 : i32
    %c0_i32_0 = arith.constant 0 : i32
    %c0_i32_1 = arith.constant 0 : i32
    return %arg0, %c0_i32, %c0_i32_0 : i32, i32, i32
  }
  func.func @transform_1(%arg0: i32, %arg1: i32) -> (i32, i32) {
    %c0_i32 = arith.constant 0 : i32
    %c0_i32_0 = arith.constant 0 : i32
    return %arg1, %c0_i32 : i32, i32
  }
  func.func @transform_2(%arg0: i32, %arg1: i32) -> (i32, i32, i32) {
    %c0_i32 = arith.constant 0 : i32
    %c0_i32_0 = arith.constant 0 : i32
    return %arg0, %arg1, %c0_i32 : i32, i32, i32
  }
}

</mosaic_0001>

<llo_original>
// kernel: tpu_custom_call.1
$region0: #{tpu_custom_call.1}
  #allocation0 [shape = 'u32[]', space=smem, size = 0x4, offset = 0x4, fixed_abs, tag = 'smem constant byte address 0x4 - core index']
  #allocation1 [shape = 'u32[72,128]{1,0:T(1,128)}', space=vmem, size = 0x9000, scoped, tag = 'internal scratch']
  %s0 = inlined_call_operand.vmem [shape: f32[1,448,49], index: 0, kind: input, shape index: {}]
  %s1 = inlined_call_operand.vmem [shape: f32[1792,448], index: 1, kind: input, shape index: {}]
  %s2 = inlined_call_operand.vmem [shape: f32[1,1792,49], index: 2, kind: output, shape index: {}]
  %s3 = sld [smem:[#allocation0]]
  $region41: #{tpu_custom_call.1} parent=0
    _
  %s5 = ssub.s32 1, %s3
  %s6 = scalar_select 0, %s5, %s3
  loop: start=0, step=1, limit=4
  $region2: #{tpu_custom_call.1} parent=0 // loop_pre_header
    _
  $region3: #{tpu_custom_call.1} parent=0 // loop_header
    %s8 = sphi 0, %s12
    %p9 = scmp.ge.s32.totalorder %s8, 4
    %s15 = sphi 0, %s27
    %s16 = sphi 0, %s23
    %s17 = sphi 0, %s15
    %s18 = sphi 0, %s16
    %s19 = sphi 0, %s17
    %s20 = sphi 0, %s18
    %s30 = sphi 0, %s32
    %s33 = sphi 0, %s30
    %s34 = sphi 0, %s33
    %s50 = sphi 0, %s34
    %s56 = sphi 0, %s58
    %s59 = sphi 0, %s56
    %s60 = sphi 0, %s59
    %s76 = sphi 0, %s60
    %s84 = sphi 0, %s86
    %s87 = sphi 0, %s84
    %s88 = sphi 0, %s87
    %s104 = sphi 0, %s88
  $region4: #{tpu_custom_call.1} parent=0 // loop_header_branch
    %11 = sbr.rel (%p9) target = $region8
  $region5: #{tpu_custom_call.1} parent=0 // loop_body
    %s13 = ssub.s32 %s8, 1
    %s14 = ssub.s32 %s8, 2
    %s21 = sadd.s32 1, %s16
    %p22 = scmp.ge.s32.totalorder %s21, 2
    %s23 = scalar_select %p22, 0, %s21
    %s24 = sadd.s32 1, %s15
    %s25 = scalar_select %p22, %s24, %s15
    %p26 = scmp.ge.s32.totalorder %s25, 1
    %s27 = scalar_select %p26, 0, %s25
    %s28 = ssub.s32 %s15, %s27
    %p29 = scmp.eq.s32.totalorder %s28, 0
    %s31 = sadd.s32 %s30, 1
    %s32 = scalar_select %p29, %s30, %s31
    %p35 = pneg %p29
    %p36 = scmp.eq.s32.totalorder %s8, 1
    %p37 = por %p35, %p36
    %p38 = scmp.ne.s32.totalorder %s30, %s33
    %p39 = scmp.eq.s32.totalorder %s8, 0
    %p40 = por %p38, %p39
    %p41 = scmp.ne.s32.totalorder %s30, %s33
    %p42 = scmp.eq.s32.totalorder %s13, 1
    %p43 = por %p41, %p42
    %p44 = scmp.ne.s32.totalorder %s33, %s34
    %p45 = scmp.eq.s32.totalorder %s13, 0
    %p46 = por %p44, %p45
    %p47 = scmp.ne.s32.totalorder %s33, %s34
    %p48 = scmp.eq.s32.totalorder %s14, 1
    %p49 = por %p47, %p48
    %p51 = scmp.ne.s32.totalorder %s34, %s50
    %p52 = scmp.eq.s32.totalorder %s14, 0
    %p53 = por %p51, %p52
    %s54 = ssub.s32 %s16, %s23
    %p55 = scmp.eq.s32.totalorder %s54, 0
    %s57 = sadd.s32 %s56, 1
    %s58 = scalar_select %p55, %s56, %s57
    %p61 = pneg %p55
    %p62 = scmp.eq.s32.totalorder %s8, 1
    %p63 = por %p61, %p62
    %p64 = scmp.ne.s32.totalorder %s56, %s59
    %p65 = scmp.eq.s32.totalorder %s8, 0
    %p66 = por %p64, %p65
    %p67 = scmp.ne.s32.totalorder %s56, %s59
    %p68 = scmp.eq.s32.totalorder %s13, 1
    %p69 = por %p67, %p68
    %p70 = scmp.ne.s32.totalorder %s59, %s60
    %p71 = scmp.eq.s32.totalorder %s13, 0
    %p72 = por %p70, %p71
    %p73 = scmp.ne.s32.totalorder %s59, %s60
    %p74 = scmp.eq.s32.totalorder %s14, 1
    %p75 = por %p73, %p74
    %p77 = scmp.ne.s32.totalorder %s60, %s76
    %p78 = scmp.eq.s32.totalorder %s14, 0
    %p79 = por %p77, %p78
    %s80 = ssub.s32 %s15, %s27
    %s81 = ssub.s32 %s16, %s23
    %s82 = sor.u32 %s80, %s81
    %p83 = scmp.eq.s32.totalorder %s82, 0
    %s85 = sadd.s32 %s84, 1
    %s86 = scalar_select %p83, %s84, %s85
    %p89 = pneg %p83
    %p90 = scmp.eq.s32.totalorder %s8, 1
    %p91 = por %p89, %p90
    %p92 = scmp.ne.s32.totalorder %s84, %s87
    %p93 = scmp.eq.s32.totalorder %s8, 0
    %p94 = por %p92, %p93
    %p95 = scmp.ne.s32.totalorder %s84, %s87
    %p96 = scmp.eq.s32.totalorder %s13, 1
    %p97 = por %p95, %p96
    %p98 = scmp.ne.s32.totalorder %s87, %s88
    %p99 = scmp.eq.s32.totalorder %s13, 0
    %p100 = por %p98, %p99
    %p101 = scmp.ne.s32.totalorder %s87, %s88
    %p102 = scmp.eq.s32.totalorder %s14, 1
    %p103 = por %p101, %p102
    %p105 = scmp.ne.s32.totalorder %s88, %s104
    %p106 = scmp.eq.s32.totalorder %s14, 0
    %p107 = por %p105, %p106
    %p108 = scmp.le.s32.totalorder 1, %s8
    %p109 = scmp.lt.s32.totalorder %s8, 3
    %p110 = pnand %p108, %p109
    %p111 = pneg %p110
    // Predicated region
    $region9: #{tpu_custom_call.1} parent=5 // pred_check
      _
    $region10: #{tpu_custom_call.1} parent=5 // pred_check_branch
      %113 = sbr.rel (%p110) target = $region12
    $region11: #{tpu_custom_call.1} parent=5 // pred_region
      %s114 = ssub.s32 %s8, 1
      // Predicated region
      $region13: #{tpu_custom_call.1} parent=11 // pred_check
        %p115 = pneg %p46
      $region14: #{tpu_custom_call.1} parent=11 // pred_check_branch
        %117 = sbr.rel (%p115) target = $region16
      $region15: #{tpu_custom_call.1} parent=11 // pred_region
        %p118 = scmp.lt.s32.totalorder %s17, 0
        %s119 = scalar_select %p118, %s17, 0
        %s120 = smul.addr %s119, 56
        %s121 = smul.addr %s120, 8
        %s122 = scalar_lea.vmem %s0, %s121
      $region16: #{tpu_custom_call.1} parent=11 // pred_fallthru
        _
    $region12: #{tpu_custom_call.1} parent=5 // pred_fallthru
      _
    %p123 = scmp.lt.s32.totalorder %s8, 2
    // Predicated region
    $region17: #{tpu_custom_call.1} parent=5 // pred_check
      %p124 = pneg %p123
    $region18: #{tpu_custom_call.1} parent=5 // pred_check_branch
      %126 = sbr.rel (%p124) target = $region20
    $region19: #{tpu_custom_call.1} parent=5 // pred_region
      // Predicated region
      $region21: #{tpu_custom_call.1} parent=19 // pred_check
        %p127 = pneg %p66
      $region22: #{tpu_custom_call.1} parent=19 // pred_check_branch
        %129 = sbr.rel (%p127) target = $region24
      $region23: #{tpu_custom_call.1} parent=19 // pred_region
        %s130 = smul.u32 112, %s16
        %p131 = scmp.lt.s32.totalorder %s130, 223
        %s132 = scalar_select %p131, %s130, 223
        %s133 = smul.addr %s132, 4
        %s134 = smul.addr %s133, 8
        %s135 = scalar_lea.vmem %s1, %s134
        %s136 = smul.u32 112, %s16
      $region24: #{tpu_custom_call.1} parent=19 // pred_fallthru
        _
    $region20: #{tpu_custom_call.1} parent=5 // pred_fallthru
      _
    %p137 = scmp.le.s32.totalorder 1, %s8
    %p138 = scmp.lt.s32.totalorder %s8, 3
    %p139 = pnand %p137, %p138
    %p140 = pneg %p139
    // Predicated region
    $region25: #{tpu_custom_call.1} parent=5 // pred_check
      _
    $region26: #{tpu_custom_call.1} parent=5 // pred_check_branch
      %142 = sbr.rel (%p139) target = $region28
    $region27: #{tpu_custom_call.1} parent=5 // pred_region
      %s143 = ssub.s32 %s8, 1
      %p144 = scmp.lt.s32.totalorder %s17, 0
      %s145 = scalar_select %p144, %s17, 0
      %s146 = smul.addr %s145, 56
      %s147 = smul.addr %s146, 8
      %s148 = scalar_lea.vmem %s0, %s147
      %p149 = pneg %p46
      %p150 = pneg %p43
      %s151 = smul.u32 112, %s18
      %p152 = scmp.lt.s32.totalorder %s151, 223
      %s153 = scalar_select %p152, %s151, 223
      %s154 = smul.addr %s153, 4
      %s155 = smul.addr %s154, 8
      %s156 = scalar_lea.vmem %s1, %s155
      %p157 = pneg %p72
      %p158 = pneg %p69
      %p159 = pneg %p100
      %p160 = pneg %p97
      %s161 = smul.u32 112, %s18
      %p162 = scmp.lt.s32.totalorder %s17, 0
      %s163 = scalar_select %p162, %s17, 0
      %p164 = scmp.lt.s32.totalorder %s161, 223
      %s165 = scalar_select %p164, %s161, 223
      %s166 = smul.addr %s163, 224
      %s167 = sadd.s32 %s165, %s166
      %s168 = smul.addr %s167, 8
      %s169 = scalar_lea.vmem %s2, %s168
      %p170 = scmp.lt.s32.totalorder %s17, 0
      %s171 = scalar_select %p170, %s17, 0
      %s172 = smul.addr %s171, 56
      %s173 = smul.addr %s172, 8
      %s174 = scalar_lea.vmem %s0, %s173
      %s175 = smul.u32 112, %s18
      %p176 = scmp.lt.s32.totalorder %s175, 223
      %s177 = scalar_select %p176, %s175, 223
      %s178 = smul.addr %s177, 4
      %s179 = smul.addr %s178, 8
      %s180 = scalar_lea.vmem %s1, %s179
      %s181 = smul.u32 112, %s18
      %s182 = smul.u32 112, %s18
      %p183 = scmp.lt.s32.totalorder %s17, 0
      %s184 = scalar_select %p183, %s17, 0
      %p185 = scmp.lt.s32.totalorder %s182, 223
      %s186 = scalar_select %p185, %s182, 223
      %s187 = smul.addr %s184, 224
      %s188 = sadd.s32 %s186, %s187
      %s189 = smul.addr %s188, 8
      %s190 = scalar_lea.vmem %s2, %s189
      %s191 = smul.u32 112, %s18
      %v192 = vld [vmem:[%s180] sm:$0xff]
      %v193 = vld [vmem:[%s180 + $0x8] sm:$0xff]
      %v194 = vld [vmem:[%s180 + $0x10] sm:$0xff]
      %v195 = vld [vmem:[%s180 + $0x18] sm:$0xff]
      %v196 = vld [vmem:[%s180 + $0x20] sm:$0xff]
      %v197 = vld [vmem:[%s180 + $0x28] sm:$0xff]
      %v198 = vld [vmem:[%s180 + $0x30] sm:$0xff]
      %v199 = vld [vmem:[%s180 + $0x38] sm:$0xff]
      %v200 = vld [vmem:[%s180 + $0x40] sm:$0xff]
      %v201 = vld [vmem:[%s180 + $0x48] sm:$0xff]
      %v202 = vld [vmem:[%s180 + $0x50] sm:$0xff]
      %v203 = vld [vmem:[%s180 + $0x58] sm:$0xff]
      %v204 = vld [vmem:[%s180 + $0x60] sm:$0xff]
      %v205 = vld [vmem:[%s180 + $0x68] sm:$0xff]
      %v206 = vld [vmem:[%s180 + $0x70] sm:$0xff]
      %v207 = vld [vmem:[%s180 + $0x78] sm:$0xff]
      %v208 = vld [vmem:[%s180 + $0x80] sm:$0xff]
      %v209 = vld [vmem:[%s180 + $0x88] sm:$0xff]
      %v210 = vld [vmem:[%s180 + $0x90] sm:$0xff]
      %v211 = vld [vmem:[%s180 + $0x98] sm:$0xff]
      %v212 = vld [vmem:[%s180 + $0xa0] sm:$0xff]
      %v213 = vld [vmem:[%s180 + $0xa8] sm:$0xff]
      %v214 = vld [vmem:[%s180 + $0xb0] sm:$0xff]
      %v215 = vld [vmem:[%s180 + $0xb8] sm:$0xff]
      %v216 = vld [vmem:[%s180 + $0xc0] sm:$0xff]
      %v217 = vld [vmem:[%s180 + $0xc8] sm:$0xff]
      %v218 = vld [vmem:[%s180 + $0xd0] sm:$0xff]
      %v219 = vld [vmem:[%s180 + $0xd8] sm:$0xff]
      %v220 = vld [vmem:[%s180 + $0xe0] sm:$0xff]
      %v221 = vld [vmem:[%s180 + $0xe8] sm:$0xff]
      %v222 = vld [vmem:[%s180 + $0xf0] sm:$0xff]
      %v223 = vld [vmem:[%s180 + $0xf8] sm:$0xff]
      %v224 = vld [vmem:[%s180 + $0x100] sm:$0xff]
      %v225 = vld [vmem:[%s180 + $0x108] sm:$0xff]
      %v226 = vld [vmem:[%s180 + $0x110] sm:$0xff]
      %v227 = vld [vmem:[%s180 + $0x118] sm:$0xff]
      %v228 = vld [vmem:[%s180 + $0x120] sm:$0xff]
      %v229 = vld [vmem:[%s180 + $0x128] sm:$0xff]
      %v230 = vld [vmem:[%s180 + $0x130] sm:$0xff]
      %v231 = vld [vmem:[%s180 + $0x138] sm:$0xff]
      %v232 = vld [vmem:[%s180 + $0x140] sm:$0xff]
      %v233 = vld [vmem:[%s180 + $0x148] sm:$0xff]
      %v234 = vld [vmem:[%s180 + $0x150] sm:$0xff]
      %v235 = vld [vmem:[%s180 + $0x158] sm:$0xff]
      %v236 = vld [vmem:[%s180 + $0x160] sm:$0xff]
      %v237 = vld [vmem:[%s180 + $0x168] sm:$0xff]
      %v238 = vld [vmem:[%s180 + $0x170] sm:$0xff]
      %v239 = vld [vmem:[%s180 + $0x178] sm:$0xff]
      %v240 = vld [vmem:[%s180 + $0x180] sm:$0xff]
      %v241 = vld [vmem:[%s180 + $0x188] sm:$0xff]
      %v242 = vld [vmem:[%s180 + $0x190] sm:$0xff]
      %v243 = vld [vmem:[%s180 + $0x198] sm:$0xff]
      %v244 = vld [vmem:[%s180 + $0x1a0] sm:$0xff]
      %v245 = vld [vmem:[%s180 + $0x1a8] sm:$0xff]
      %v246 = vld [vmem:[%s180 + $0x1b0] sm:$0xff]
      %v247 = vld [vmem:[%s180 + $0x1b8] sm:$0xff]
      %v248 = vld [vmem:[%s180 + $0x1c0] sm:$0xff]
      %v249 = vld [vmem:[%s180 + $0x1c8] sm:$0xff]
      %v250 = vld [vmem:[%s180 + $0x1d0] sm:$0xff]
      %v251 = vld [vmem:[%s180 + $0x1d8] sm:$0xff]
      %v252 = vld [vmem:[%s180 + $0x1e0] sm:$0xff]
      %v253 = vld [vmem:[%s180 + $0x1e8] sm:$0xff]
      %v254 = vld [vmem:[%s180 + $0x1f0] sm:$0xff]
      %v255 = vld [vmem:[%s180 + $0x1f8] sm:$0xff]
      %v256 = vld [vmem:[%s180 + $0x200] sm:$0xff]
      %v257 = vld [vmem:[%s180 + $0x208] sm:$0xff]
      %v258 = vld [vmem:[%s180 + $0x210] sm:$0xff]
      %v259 = vld [vmem:[%s180 + $0x218] sm:$0xff]
      %v260 = vld [vmem:[%s180 + $0x220] sm:$0xff]
      %v261 = vld [vmem:[%s180 + $0x228] sm:$0xff]
      %v262 = vld [vmem:[%s180 + $0x230] sm:$0xff]
      %v263 = vld [vmem:[%s180 + $0x238] sm:$0xff]
      %v264 = vld [vmem:[%s180 + $0x240] sm:$0xff]
      %v265 = vld [vmem:[%s180 + $0x248] sm:$0xff]
      %v266 = vld [vmem:[%s180 + $0x250] sm:$0xff]
      %v267 = vld [vmem:[%s180 + $0x258] sm:$0xff]
      %v268 = vld [vmem:[%s180 + $0x260] sm:$0xff]
      %v269 = vld [vmem:[%s180 + $0x268] sm:$0xff]
      %v270 = vld [vmem:[%s180 + $0x270] sm:$0xff]
      %v271 = vld [vmem:[%s180 + $0x278] sm:$0xff]
      %v272 = vld [vmem:[%s180 + $0x280] sm:$0xff]
      %v273 = vld [vmem:[%s180 + $0x288] sm:$0xff]
      %v274 = vld [vmem:[%s180 + $0x290] sm:$0xff]
      %v275 = vld [vmem:[%s180 + $0x298] sm:$0xff]
      %v276 = vld [vmem:[%s180 + $0x2a0] sm:$0xff]
      %v277 = vld [vmem:[%s180 + $0x2a8] sm:$0xff]
      %v278 = vld [vmem:[%s180 + $0x2b0] sm:$0xff]
      %v279 = vld [vmem:[%s180 + $0x2b8] sm:$0xff]
      %v280 = vld [vmem:[%s180 + $0x2c0] sm:$0xff]
      %v281 = vld [vmem:[%s180 + $0x2c8] sm:$0xff]
      %v282 = vld [vmem:[%s180 + $0x2d0] sm:$0xff]
      %v283 = vld [vmem:[%s180 + $0x2d8] sm:$0xff]
      %v284 = vld [vmem:[%s180 + $0x2e0] sm:$0xff]
      %v285 = vld [vmem:[%s180 + $0x2e8] sm:$0xff]
      %v286 = vld [vmem:[%s180 + $0x2f0] sm:$0xff]
      %v287 = vld [vmem:[%s180 + $0x2f8] sm:$0xff]
      %v288 = vld [vmem:[%s180 + $0x300] sm:$0xff]
      %v289 = vld [vmem:[%s180 + $0x308] sm:$0xff]
      %v290 = vld [vmem:[%s180 + $0x310] sm:$0xff]
      %v291 = vld [vmem:[%s180 + $0x318] sm:$0xff]
      %v292 = vld [vmem:[%s180 + $0x320] sm:$0xff]
      %v293 = vld [vmem:[%s180 + $0x328] sm:$0xff]
      %v294 = vld [vmem:[%s180 + $0x330] sm:$0xff]
      %v295 = vld [vmem:[%s180 + $0x338] sm:$0xff]
      %v296 = vld [vmem:[%s180 + $0x340] sm:$0xff]
      %v297 = vld [vmem:[%s180 + $0x348] sm:$0xff]
      %v298 = vld [vmem:[%s180 + $0x350] sm:$0xff]
      %v299 = vld [vmem:[%s180 + $0x358] sm:$0xff]
      %v300 = vld [vmem:[%s180 + $0x360] sm:$0xff]
      %v301 = vld [vmem:[%s180 + $0x368] sm:$0xff]
      %v302 = vld [vmem:[%s180 + $0x370] sm:$0xff]
      %v303 = vld [vmem:[%s180 + $0x378] sm:$0xff]
      %v304 = vld [vmem:[%s180 + $0x380] sm:$0xff]
      %v305 = vld [vmem:[%s180 + $0x388] sm:$0xff]
      %v306 = vld [vmem:[%s180 + $0x390] sm:$0xff]
      %v307 = vld [vmem:[%s180 + $0x398] sm:$0xff]
      %v308 = vld [vmem:[%s180 + $0x3a0] sm:$0xff]
      %v309 = vld [vmem:[%s180 + $0x3a8] sm:$0xff]
      %v310 = vld [vmem:[%s180 + $0x3b0] sm:$0xff]
      %v311 = vld [vmem:[%s180 + $0x3b8] sm:$0xff]
      %v312 = vld [vmem:[%s180 + $0x3c0] sm:$0xff]
      %v313 = vld [vmem:[%s180 + $0x3c8] sm:$0xff]
      %v314 = vld [vmem:[%s180 + $0x3d0] sm:$0xff]
      %v315 = vld [vmem:[%s180 + $0x3d8] sm:$0xff]
      %v316 = vld [vmem:[%s180 + $0x3e0] sm:$0xff]
      %v317 = vld [vmem:[%s180 + $0x3e8] sm:$0xff]
      %v318 = vld [vmem:[%s180 + $0x3f0] sm:$0xff]
      %v319 = vld [vmem:[%s180 + $0x3f8] sm:$0xff]
      %v320 = vld [vmem:[%s180 + $0x400] sm:$0xff]
      %v321 = vld [vmem:[%s180 + $0x408] sm:$0xff]
      %v322 = vld [vmem:[%s180 + $0x410] sm:$0xff]
      %v323 = vld [vmem:[%s180 + $0x418] sm:$0xff]
      %v324 = vld [vmem:[%s180 + $0x420] sm:$0xff]
      %v325 = vld [vmem:[%s180 + $0x428] sm:$0xff]
      %v326 = vld [vmem:[%s180 + $0x430] sm:$0xff]
      %v327 = vld [vmem:[%s180 + $0x438] sm:$0xff]
      %v328 = vld [vmem:[%s180 + $0x440] sm:$0xff]
      %v329 = vld [vmem:[%s180 + $0x448] sm:$0xff]
      %v330 = vld [vmem:[%s180 + $0x450] sm:$0xff]
      %v331 = vld [vmem:[%s180 + $0x458] sm:$0xff]
      %v332 = vld [vmem:[%s180 + $0x460] sm:$0xff]
      %v333 = vld [vmem:[%s180 + $0x468] sm:$0xff]
      %v334 = vld [vmem:[%s180 + $0x470] sm:$0xff]
      %v335 = vld [vmem:[%s180 + $0x478] sm:$0xff]
      %v336 = vld [vmem:[%s180 + $0x480] sm:$0xff]
      %v337 = vld [vmem:[%s180 + $0x488] sm:$0xff]
      %v338 = vld [vmem:[%s180 + $0x490] sm:$0xff]
      %v339 = vld [vmem:[%s180 + $0x498] sm:$0xff]
      %v340 = vld [vmem:[%s180 + $0x4a0] sm:$0xff]
      %v341 = vld [vmem:[%s180 + $0x4a8] sm:$0xff]
      %v342 = vld [vmem:[%s180 + $0x4b0] sm:$0xff]
      %v343 = vld [vmem:[%s180 + $0x4b8] sm:$0xff]
      %v344 = vld [vmem:[%s180 + $0x4c0] sm:$0xff]
      %v345 = vld [vmem:[%s180 + $0x4c8] sm:$0xff]
      %v346 = vld [vmem:[%s180 + $0x4d0] sm:$0xff]
      %v347 = vld [vmem:[%s180 + $0x4d8] sm:$0xff]
      %v348 = vld [vmem:[%s180 + $0x4e0] sm:$0xff]
      %v349 = vld [vmem:[%s180 + $0x4e8] sm:$0xff]
      %v350 = vld [vmem:[%s180 + $0x4f0] sm:$0xff]
      %v351 = vld [vmem:[%s180 + $0x4f8] sm:$0xff]
      %v352 = vld [vmem:[%s180 + $0x500] sm:$0xff]
      %v353 = vld [vmem:[%s180 + $0x508] sm:$0xff]
      %v354 = vld [vmem:[%s180 + $0x510] sm:$0xff]
      %v355 = vld [vmem:[%s180 + $0x518] sm:$0xff]
      %v356 = vld [vmem:[%s180 + $0x520] sm:$0xff]
      %v357 = vld [vmem:[%s180 + $0x528] sm:$0xff]
      %v358 = vld [vmem:[%s180 + $0x530] sm:$0xff]
      %v359 = vld [vmem:[%s180 + $0x538] sm:$0xff]
      %v360 = vld [vmem:[%s180 + $0x540] sm:$0xff]
      %v361 = vld [vmem:[%s180 + $0x548] sm:$0xff]
      %v362 = vld [vmem:[%s180 + $0x550] sm:$0xff]
      %v363 = vld [vmem:[%s180 + $0x558] sm:$0xff]
      %v364 = vld [vmem:[%s180 + $0x560] sm:$0xff]
      %v365 = vld [vmem:[%s180 + $0x568] sm:$0xff]
      %v366 = vld [vmem:[%s180 + $0x570] sm:$0xff]
      %v367 = vld [vmem:[%s180 + $0x578] sm:$0xff]
      %v368 = vld [vmem:[%s180 + $0x580] sm:$0xff]
      %v369 = vld [vmem:[%s180 + $0x588] sm:$0xff]
      %v370 = vld [vmem:[%s180 + $0x590] sm:$0xff]
      %v371 = vld [vmem:[%s180 + $0x598] sm:$0xff]
      %v372 = vld [vmem:[%s180 + $0x5a0] sm:$0xff]
      %v373 = vld [vmem:[%s180 + $0x5a8] sm:$0xff]
      %v374 = vld [vmem:[%s180 + $0x5b0] sm:$0xff]
      %v375 = vld [vmem:[%s180 + $0x5b8] sm:$0xff]
      %v376 = vld [vmem:[%s180 + $0x5c0] sm:$0xff]
      %v377 = vld [vmem:[%s180 + $0x5c8] sm:$0xff]
      %v378 = vld [vmem:[%s180 + $0x5d0] sm:$0xff]
      %v379 = vld [vmem:[%s180 + $0x5d8] sm:$0xff]
      %v380 = vld [vmem:[%s180 + $0x5e0] sm:$0xff]
      %v381 = vld [vmem:[%s180 + $0x5e8] sm:$0xff]
      %v382 = vld [vmem:[%s180 + $0x5f0] sm:$0xff]
      %v383 = vld [vmem:[%s180 + $0x5f8] sm:$0xff]
      %v384 = vld [vmem:[%s180 + $0x600] sm:$0xff]
      %v385 = vld [vmem:[%s180 + $0x608] sm:$0xff]
      %v386 = vld [vmem:[%s180 + $0x610] sm:$0xff]
      %v387 = vld [vmem:[%s180 + $0x618] sm:$0xff]
      %v388 = vld [vmem:[%s180 + $0x620] sm:$0xff]
      %v389 = vld [vmem:[%s180 + $0x628] sm:$0xff]
      %v390 = vld [vmem:[%s180 + $0x630] sm:$0xff]
      %v391 = vld [vmem:[%s180 + $0x638] sm:$0xff]
      %v392 = vld [vmem:[%s180 + $0x640] sm:$0xff]
      %v393 = vld [vmem:[%s180 + $0x648] sm:$0xff]
      %v394 = vld [vmem:[%s180 + $0x650] sm:$0xff]
      %v395 = vld [vmem:[%s180 + $0x658] sm:$0xff]
      %v396 = vld [vmem:[%s180 + $0x660] sm:$0xff]
      %v397 = vld [vmem:[%s180 + $0x668] sm:$0xff]
      %v398 = vld [vmem:[%s180 + $0x670] sm:$0xff]
      %v399 = vld [vmem:[%s180 + $0x678] sm:$0xff]
      %v400 = vld [vmem:[%s180 + $0x680] sm:$0xff]
      %v401 = vld [vmem:[%s180 + $0x688] sm:$0xff]
      %v402 = vld [vmem:[%s180 + $0x690] sm:$0xff]
      %v403 = vld [vmem:[%s180 + $0x698] sm:$0xff]
      %v404 = vld [vmem:[%s180 + $0x6a0] sm:$0xff]
      %v405 = vld [vmem:[%s180 + $0x6a8] sm:$0xff]
      %v406 = vld [vmem:[%s180 + $0x6b0] sm:$0xff]
      %v407 = vld [vmem:[%s180 + $0x6b8] sm:$0xff]
      %v408 = vld [vmem:[%s180 + $0x6c0] sm:$0xff]
      %v409 = vld [vmem:[%s180 + $0x6c8] sm:$0xff]
      %v410 = vld [vmem:[%s180 + $0x6d0] sm:$0xff]
      %v411 = vld [vmem:[%s180 + $0x6d8] sm:$0xff]
      %v412 = vld [vmem:[%s180 + $0x6e0] sm:$0xff]
      %v413 = vld [vmem:[%s180 + $0x6e8] sm:$0xff]
      %v414 = vld [vmem:[%s180 + $0x6f0] sm:$0xff]
      %v415 = vld [vmem:[%s180 + $0x6f8] sm:$0xff]
      %v416 = vld [vmem:[%s180 + $0x700] sm:$0xff]
      %v417 = vld [vmem:[%s180 + $0x708] sm:$0xff]
      %v418 = vld [vmem:[%s180 + $0x710] sm:$0xff]
      %v419 = vld [vmem:[%s180 + $0x718] sm:$0xff]
      %v420 = vld [vmem:[%s180 + $0x720] sm:$0xff]
      %v421 = vld [vmem:[%s180 + $0x728] sm:$0xff]
      %v422 = vld [vmem:[%s180 + $0x730] sm:$0xff]
      %v423 = vld [vmem:[%s180 + $0x738] sm:$0xff]
      %v424 = vld [vmem:[%s180 + $0x740] sm:$0xff]
      %v425 = vld [vmem:[%s180 + $0x748] sm:$0xff]
      %v426 = vld [vmem:[%s180 + $0x750] sm:$0xff]
      %v427 = vld [vmem:[%s180 + $0x758] sm:$0xff]
      %v428 = vld [vmem:[%s180 + $0x760] sm:$0xff]
      %v429 = vld [vmem:[%s180 + $0x768] sm:$0xff]
      %v430 = vld [vmem:[%s180 + $0x770] sm:$0xff]
      %v431 = vld [vmem:[%s180 + $0x778] sm:$0xff]
      %v432 = vld [vmem:[%s180 + $0x780] sm:$0xff]
      %v433 = vld [vmem:[%s180 + $0x788] sm:$0xff]
      %v434 = vld [vmem:[%s180 + $0x790] sm:$0xff]
      %v435 = vld [vmem:[%s180 + $0x798] sm:$0xff]
      %v436 = vld [vmem:[%s180 + $0x7a0] sm:$0xff]
      %v437 = vld [vmem:[%s180 + $0x7a8] sm:$0xff]
      %v438 = vld [vmem:[%s180 + $0x7b0] sm:$0xff]
      %v439 = vld [vmem:[%s180 + $0x7b8] sm:$0xff]
      %v440 = vld [vmem:[%s180 + $0x7c0] sm:$0xff]
      %v441 = vld [vmem:[%s180 + $0x7c8] sm:$0xff]
      %v442 = vld [vmem:[%s180 + $0x7d0] sm:$0xff]
      %v443 = vld [vmem:[%s180 + $0x7d8] sm:$0xff]
      %v444 = vld [vmem:[%s180 + $0x7e0] sm:$0xff]
      %v445 = vld [vmem:[%s180 + $0x7e8] sm:$0xff]
      %v446 = vld [vmem:[%s180 + $0x7f0] sm:$0xff]
      %v447 = vld [vmem:[%s180 + $0x7f8] sm:$0xff]
      %v448 = vld [vmem:[%s180 + $0x800] sm:$0xff]
      %v449 = vld [vmem:[%s180 + $0x808] sm:$0xff]
      %v450 = vld [vmem:[%s180 + $0x810] sm:$0xff]
      %v451 = vld [vmem:[%s180 + $0x818] sm:$0xff]
      %v452 = vld [vmem:[%s180 + $0x820] sm:$0xff]
      %v453 = vld [vmem:[%s180 + $0x828] sm:$0xff]
      %v454 = vld [vmem:[%s180 + $0x830] sm:$0xff]
      %v455 = vld [vmem:[%s180 + $0x838] sm:$0xff]
      %v456 = vld [vmem:[%s180 + $0x840] sm:$0xff]
      %v457 = vld [vmem:[%s180 + $0x848] sm:$0xff]
      %v458 = vld [vmem:[%s180 + $0x850] sm:$0xff]
      %v459 = vld [vmem:[%s180 + $0x858] sm:$0xff]
      %v460 = vld [vmem:[%s180 + $0x860] sm:$0xff]
      %v461 = vld [vmem:[%s180 + $0x868] sm:$0xff]
      %v462 = vld [vmem:[%s180 + $0x870] sm:$0xff]
      %v463 = vld [vmem:[%s180 + $0x878] sm:$0xff]
      %v464 = vld [vmem:[%s180 + $0x880] sm:$0xff]
      %v465 = vld [vmem:[%s180 + $0x888] sm:$0xff]
      %v466 = vld [vmem:[%s180 + $0x890] sm:$0xff]
      %v467 = vld [vmem:[%s180 + $0x898] sm:$0xff]
      %v468 = vld [vmem:[%s180 + $0x8a0] sm:$0xff]
      %v469 = vld [vmem:[%s180 + $0x8a8] sm:$0xff]
      %v470 = vld [vmem:[%s180 + $0x8b0] sm:$0xff]
      %v471 = vld [vmem:[%s180 + $0x8b8] sm:$0xff]
      %v472 = vld [vmem:[%s180 + $0x8c0] sm:$0xff]
      %v473 = vld [vmem:[%s180 + $0x8c8] sm:$0xff]
      %v474 = vld [vmem:[%s180 + $0x8d0] sm:$0xff]
      %v475 = vld [vmem:[%s180 + $0x8d8] sm:$0xff]
      %v476 = vld [vmem:[%s180 + $0x8e0] sm:$0xff]
      %v477 = vld [vmem:[%s180 + $0x8e8] sm:$0xff]
      %v478 = vld [vmem:[%s180 + $0x8f0] sm:$0xff]
      %v479 = vld [vmem:[%s180 + $0x8f8] sm:$0xff]
      %v480 = vld [vmem:[%s180 + $0x900] sm:$0xff]
      %v481 = vld [vmem:[%s180 + $0x908] sm:$0xff]
      %v482 = vld [vmem:[%s180 + $0x910] sm:$0xff]
      %v483 = vld [vmem:[%s180 + $0x918] sm:$0xff]
      %v484 = vld [vmem:[%s180 + $0x920] sm:$0xff]
      %v485 = vld [vmem:[%s180 + $0x928] sm:$0xff]
      %v486 = vld [vmem:[%s180 + $0x930] sm:$0xff]
      %v487 = vld [vmem:[%s180 + $0x938] sm:$0xff]
      %v488 = vld [vmem:[%s180 + $0x940] sm:$0xff]
      %v489 = vld [vmem:[%s180 + $0x948] sm:$0xff]
      %v490 = vld [vmem:[%s180 + $0x950] sm:$0xff]
      %v491 = vld [vmem:[%s180 + $0x958] sm:$0xff]
      %v492 = vld [vmem:[%s180 + $0x960] sm:$0xff]
      %v493 = vld [vmem:[%s180 + $0x968] sm:$0xff]
      %v494 = vld [vmem:[%s180 + $0x970] sm:$0xff]
      %v495 = vld [vmem:[%s180 + $0x978] sm:$0xff]
      %v496 = vld [vmem:[%s180 + $0x980] sm:$0xff]
      %v497 = vld [vmem:[%s180 + $0x988] sm:$0xff]
      %v498 = vld [vmem:[%s180 + $0x990] sm:$0xff]
      %v499 = vld [vmem:[%s180 + $0x998] sm:$0xff]
      %v500 = vld [vmem:[%s180 + $0x9a0] sm:$0xff]
      %v501 = vld [vmem:[%s180 + $0x9a8] sm:$0xff]
      %v502 = vld [vmem:[%s180 + $0x9b0] sm:$0xff]
      %v503 = vld [vmem:[%s180 + $0x9b8] sm:$0xff]
      %v504 = vld [vmem:[%s180 + $0x9c0] sm:$0xff]
      %v505 = vld [vmem:[%s180 + $0x9c8] sm:$0xff]
      %v506 = vld [vmem:[%s180 + $0x9d0] sm:$0xff]
      %v507 = vld [vmem:[%s180 + $0x9d8] sm:$0xff]
      %v508 = vld [vmem:[%s180 + $0x9e0] sm:$0xff]
      %v509 = vld [vmem:[%s180 + $0x9e8] sm:$0xff]
      %v510 = vld [vmem:[%s180 + $0x9f0] sm:$0xff]
      %v511 = vld [vmem:[%s180 + $0x9f8] sm:$0xff]
      %v512 = vld [vmem:[%s180 + $0xa00] sm:$0xff]
      %v513 = vld [vmem:[%s180 + $0xa08] sm:$0xff]
      %v514 = vld [vmem:[%s180 + $0xa10] sm:$0xff]
      %v515 = vld [vmem:[%s180 + $0xa18] sm:$0xff]
      %v516 = vld [vmem:[%s180 + $0xa20] sm:$0xff]
      %v517 = vld [vmem:[%s180 + $0xa28] sm:$0xff]
      %v518 = vld [vmem:[%s180 + $0xa30] sm:$0xff]
      %v519 = vld [vmem:[%s180 + $0xa38] sm:$0xff]
      %v520 = vld [vmem:[%s180 + $0xa40] sm:$0xff]
      %v521 = vld [vmem:[%s180 + $0xa48] sm:$0xff]
      %v522 = vld [vmem:[%s180 + $0xa50] sm:$0xff]
      %v523 = vld [vmem:[%s180 + $0xa58] sm:$0xff]
      %v524 = vld [vmem:[%s180 + $0xa60] sm:$0xff]
      %v525 = vld [vmem:[%s180 + $0xa68] sm:$0xff]
      %v526 = vld [vmem:[%s180 + $0xa70] sm:$0xff]
      %v527 = vld [vmem:[%s180 + $0xa78] sm:$0xff]
      %v528 = vld [vmem:[%s180 + $0xa80] sm:$0xff]
      %v529 = vld [vmem:[%s180 + $0xa88] sm:$0xff]
      %v530 = vld [vmem:[%s180 + $0xa90] sm:$0xff]
      %v531 = vld [vmem:[%s180 + $0xa98] sm:$0xff]
      %v532 = vld [vmem:[%s180 + $0xaa0] sm:$0xff]
      %v533 = vld [vmem:[%s180 + $0xaa8] sm:$0xff]
      %v534 = vld [vmem:[%s180 + $0xab0] sm:$0xff]
      %v535 = vld [vmem:[%s180 + $0xab8] sm:$0xff]
      %v536 = vld [vmem:[%s180 + $0xac0] sm:$0xff]
      %v537 = vld [vmem:[%s180 + $0xac8] sm:$0xff]
      %v538 = vld [vmem:[%s180 + $0xad0] sm:$0xff]
      %v539 = vld [vmem:[%s180 + $0xad8] sm:$0xff]
      %v540 = vld [vmem:[%s180 + $0xae0] sm:$0xff]
      %v541 = vld [vmem:[%s180 + $0xae8] sm:$0xff]
      %v542 = vld [vmem:[%s180 + $0xaf0] sm:$0xff]
      %v543 = vld [vmem:[%s180 + $0xaf8] sm:$0xff]
      %v544 = vld [vmem:[%s180 + $0xb00] sm:$0xff]
      %v545 = vld [vmem:[%s180 + $0xb08] sm:$0xff]
      %v546 = vld [vmem:[%s180 + $0xb10] sm:$0xff]
      %v547 = vld [vmem:[%s180 + $0xb18] sm:$0xff]
      %v548 = vld [vmem:[%s180 + $0xb20] sm:$0xff]
      %v549 = vld [vmem:[%s180 + $0xb28] sm:$0xff]
      %v550 = vld [vmem:[%s180 + $0xb30] sm:$0xff]
      %v551 = vld [vmem:[%s180 + $0xb38] sm:$0xff]
      %v552 = vld [vmem:[%s180 + $0xb40] sm:$0xff]
      %v553 = vld [vmem:[%s180 + $0xb48] sm:$0xff]
      %v554 = vld [vmem:[%s180 + $0xb50] sm:$0xff]
      %v555 = vld [vmem:[%s180 + $0xb58] sm:$0xff]
      %v556 = vld [vmem:[%s180 + $0xb60] sm:$0xff]
      %v557 = vld [vmem:[%s180 + $0xb68] sm:$0xff]
      %v558 = vld [vmem:[%s180 + $0xb70] sm:$0xff]
      %v559 = vld [vmem:[%s180 + $0xb78] sm:$0xff]
      %v560 = vld [vmem:[%s180 + $0xb80] sm:$0xff]
      %v561 = vld [vmem:[%s180 + $0xb88] sm:$0xff]
      %v562 = vld [vmem:[%s180 + $0xb90] sm:$0xff]
      %v563 = vld [vmem:[%s180 + $0xb98] sm:$0xff]
      %v564 = vld [vmem:[%s180 + $0xba0] sm:$0xff]
      %v565 = vld [vmem:[%s180 + $0xba8] sm:$0xff]
      %v566 = vld [vmem:[%s180 + $0xbb0] sm:$0xff]
      %v567 = vld [vmem:[%s180 + $0xbb8] sm:$0xff]
      %v568 = vld [vmem:[%s180 + $0xbc0] sm:$0xff]
      %v569 = vld [vmem:[%s180 + $0xbc8] sm:$0xff]
      %v570 = vld [vmem:[%s180 + $0xbd0] sm:$0xff]
      %v571 = vld [vmem:[%s180 + $0xbd8] sm:$0xff]
      %v572 = vld [vmem:[%s180 + $0xbe0] sm:$0xff]
      %v573 = vld [vmem:[%s180 + $0xbe8] sm:$0xff]
      %v574 = vld [vmem:[%s180 + $0xbf0] sm:$0xff]
      %v575 = vld [vmem:[%s180 + $0xbf8] sm:$0xff]
      %v576 = vld [vmem:[%s180 + $0xc00] sm:$0xff]
      %v577 = vld [vmem:[%s180 + $0xc08] sm:$0xff]
      %v578 = vld [vmem:[%s180 + $0xc10] sm:$0xff]
      %v579 = vld [vmem:[%s180 + $0xc18] sm:$0xff]
      %v580 = vld [vmem:[%s180 + $0xc20] sm:$0xff]
      %v581 = vld [vmem:[%s180 + $0xc28] sm:$0xff]
      %v582 = vld [vmem:[%s180 + $0xc30] sm:$0xff]
      %v583 = vld [vmem:[%s180 + $0xc38] sm:$0xff]
      %v584 = vld [vmem:[%s180 + $0xc40] sm:$0xff]
      %v585 = vld [vmem:[%s180 + $0xc48] sm:$0xff]
      %v586 = vld [vmem:[%s180 + $0xc50] sm:$0xff]
      %v587 = vld [vmem:[%s180 + $0xc58] sm:$0xff]
      %v588 = vld [vmem:[%s180 + $0xc60] sm:$0xff]
      %v589 = vld [vmem:[%s180 + $0xc68] sm:$0xff]
      %v590 = vld [vmem:[%s180 + $0xc70] sm:$0xff]
      %v591 = vld [vmem:[%s180 + $0xc78] sm:$0xff]
      %v592 = vld [vmem:[%s180 + $0xc80] sm:$0xff]
      %v593 = vld [vmem:[%s180 + $0xc88] sm:$0xff]
      %v594 = vld [vmem:[%s180 + $0xc90] sm:$0xff]
      %v595 = vld [vmem:[%s180 + $0xc98] sm:$0xff]
      %v596 = vld [vmem:[%s180 + $0xca0] sm:$0xff]
      %v597 = vld [vmem:[%s180 + $0xca8] sm:$0xff]
      %v598 = vld [vmem:[%s180 + $0xcb0] sm:$0xff]
      %v599 = vld [vmem:[%s180 + $0xcb8] sm:$0xff]
      %v600 = vld [vmem:[%s180 + $0xcc0] sm:$0xff]
      %v601 = vld [vmem:[%s180 + $0xcc8] sm:$0xff]
      %v602 = vld [vmem:[%s180 + $0xcd0] sm:$0xff]
      %v603 = vld [vmem:[%s180 + $0xcd8] sm:$0xff]
      %v604 = vld [vmem:[%s180 + $0xce0] sm:$0xff]
      %v605 = vld [vmem:[%s180 + $0xce8] sm:$0xff]
      %v606 = vld [vmem:[%s180 + $0xcf0] sm:$0xff]
      %v607 = vld [vmem:[%s180 + $0xcf8] sm:$0xff]
      %v608 = vld [vmem:[%s180 + $0xd00] sm:$0xff]
      %v609 = vld [vmem:[%s180 + $0xd08] sm:$0xff]
      %v610 = vld [vmem:[%s180 + $0xd10] sm:$0xff]
      %v611 = vld [vmem:[%s180 + $0xd18] sm:$0xff]
      %v612 = vld [vmem:[%s180 + $0xd20] sm:$0xff]
      %v613 = vld [vmem:[%s180 + $0xd28] sm:$0xff]
      %v614 = vld [vmem:[%s180 + $0xd30] sm:$0xff]
      %v615 = vld [vmem:[%s180 + $0xd38] sm:$0xff]
      %v616 = vld [vmem:[%s180 + $0xd40] sm:$0xff]
      %v617 = vld [vmem:[%s180 + $0xd48] sm:$0xff]
      %v618 = vld [vmem:[%s180 + $0xd50] sm:$0xff]
      %v619 = vld [vmem:[%s180 + $0xd58] sm:$0xff]
      %v620 = vld [vmem:[%s180 + $0xd60] sm:$0xff]
      %v621 = vld [vmem:[%s180 + $0xd68] sm:$0xff]
      %v622 = vld [vmem:[%s180 + $0xd70] sm:$0xff]
      %v623 = vld [vmem:[%s180 + $0xd78] sm:$0xff]
      %v624 = vld [vmem:[%s180 + $0xd80] sm:$0xff]
      %v625 = vld [vmem:[%s180 + $0xd88] sm:$0xff]
      %v626 = vld [vmem:[%s180 + $0xd90] sm:$0xff]
      %v627 = vld [vmem:[%s180 + $0xd98] sm:$0xff]
      %v628 = vld [vmem:[%s180 + $0xda0] sm:$0xff]
      %v629 = vld [vmem:[%s180 + $0xda8] sm:$0xff]
      %v630 = vld [vmem:[%s180 + $0xdb0] sm:$0xff]
      %v631 = vld [vmem:[%s180 + $0xdb8] sm:$0xff]
      %v632 = vld [vmem:[%s180 + $0xdc0] sm:$0xff]
      %v633 = vld [vmem:[%s180 + $0xdc8] sm:$0xff]
      %v634 = vld [vmem:[%s180 + $0xdd0] sm:$0xff]
      %v635 = vld [vmem:[%s180 + $0xdd8] sm:$0xff]
      %v636 = vld [vmem:[%s180 + $0xde0] sm:$0xff]
      %v637 = vld [vmem:[%s180 + $0xde8] sm:$0xff]
      %v638 = vld [vmem:[%s180 + $0xdf0] sm:$0xff]
      %v639 = vld [vmem:[%s180 + $0xdf8] sm:$0xff]
      %v640 = vld [vmem:[%s174] sm:$0xff]
      %v641 = vld [vmem:[%s174 + $0x8] sm:$0xff]
      %v642 = vld [vmem:[%s174 + $0x10] sm:$0xff]
      %v643 = vld [vmem:[%s174 + $0x18] sm:$0xff]
      %v644 = vld [vmem:[%s174 + $0x20] sm:$0xff]
      %v645 = vld [vmem:[%s174 + $0x28] sm:$0xff]
      %v646 = vld [vmem:[%s174 + $0x30] sm:$0xff]
      %v647 = vld [vmem:[%s174 + $0x38] sm:$0xff]
      %v648 = vld [vmem:[%s174 + $0x40] sm:$0xff]
      %v649 = vld [vmem:[%s174 + $0x48] sm:$0xff]
      %v650 = vld [vmem:[%s174 + $0x50] sm:$0xff]
      %v651 = vld [vmem:[%s174 + $0x58] sm:$0xff]
      %v652 = vld [vmem:[%s174 + $0x60] sm:$0xff]
      %v653 = vld [vmem:[%s174 + $0x68] sm:$0xff]
      %v654 = vld [vmem:[%s174 + $0x70] sm:$0xff]
      %v655 = vld [vmem:[%s174 + $0x78] sm:$0xff]
      %v656 = vld [vmem:[%s174 + $0x80] sm:$0xff]
      %v657 = vld [vmem:[%s174 + $0x88] sm:$0xff]
      %v658 = vld [vmem:[%s174 + $0x90] sm:$0xff]
      %v659 = vld [vmem:[%s174 + $0x98] sm:$0xff]
      %v660 = vld [vmem:[%s174 + $0xa0] sm:$0xff]
      %v661 = vld [vmem:[%s174 + $0xa8] sm:$0xff]
      %v662 = vld [vmem:[%s174 + $0xb0] sm:$0xff]
      %v663 = vld [vmem:[%s174 + $0xb8] sm:$0xff]
      %v664 = vld [vmem:[%s174 + $0xc0] sm:$0xff]
      %v665 = vld [vmem:[%s174 + $0xc8] sm:$0xff]
      %v666 = vld [vmem:[%s174 + $0xd0] sm:$0xff]
      %v667 = vld [vmem:[%s174 + $0xd8] sm:$0xff]
      %v668 = vld [vmem:[%s174 + $0xe0] sm:$0xff]
      %v669 = vld [vmem:[%s174 + $0xe8] sm:$0xff]
      %v670 = vld [vmem:[%s174 + $0xf0] sm:$0xff]
      %v671 = vld [vmem:[%s174 + $0xf8] sm:$0xff]
      %v672 = vld [vmem:[%s174 + $0x100] sm:$0xff]
      %v673 = vld [vmem:[%s174 + $0x108] sm:$0xff]
      %v674 = vld [vmem:[%s174 + $0x110] sm:$0xff]
      %v675 = vld [vmem:[%s174 + $0x118] sm:$0xff]
      %v676 = vld [vmem:[%s174 + $0x120] sm:$0xff]
      %v677 = vld [vmem:[%s174 + $0x128] sm:$0xff]
      %v678 = vld [vmem:[%s174 + $0x130] sm:$0xff]
      %v679 = vld [vmem:[%s174 + $0x138] sm:$0xff]
      %v680 = vld [vmem:[%s174 + $0x140] sm:$0xff]
      %v681 = vld [vmem:[%s174 + $0x148] sm:$0xff]
      %v682 = vld [vmem:[%s174 + $0x150] sm:$0xff]
      %v683 = vld [vmem:[%s174 + $0x158] sm:$0xff]
      %v684 = vld [vmem:[%s174 + $0x160] sm:$0xff]
      %v685 = vld [vmem:[%s174 + $0x168] sm:$0xff]
      %v686 = vld [vmem:[%s174 + $0x170] sm:$0xff]
      %v687 = vld [vmem:[%s174 + $0x178] sm:$0xff]
      %v688 = vld [vmem:[%s174 + $0x180] sm:$0xff]
      %v689 = vld [vmem:[%s174 + $0x188] sm:$0xff]
      %v690 = vld [vmem:[%s174 + $0x190] sm:$0xff]
      %v691 = vld [vmem:[%s174 + $0x198] sm:$0xff]
      %v692 = vld [vmem:[%s174 + $0x1a0] sm:$0xff]
      %v693 = vld [vmem:[%s174 + $0x1a8] sm:$0xff]
      %v694 = vld [vmem:[%s174 + $0x1b0] sm:$0xff]
      %v695 = vld [vmem:[%s174 + $0x1b8] sm:$0xff]
      %vm696 = vcmask 523264
      %v698 = vsel %vm696, %v195, 0
      %v701 = vsel %vm696, %v199, 0
      %v704 = vsel %vm696, %v203, 0
      %v707 = vsel %vm696, %v207, 0
      %v710 = vsel %vm696, %v211, 0
      %v713 = vsel %vm696, %v215, 0
      %v716 = vsel %vm696, %v219, 0
      %v719 = vsel %vm696, %v223, 0
      %v722 = vsel %vm696, %v227, 0
      %v725 = vsel %vm696, %v231, 0
      %v728 = vsel %vm696, %v235, 0
      %v731 = vsel %vm696, %v239, 0
      %v734 = vsel %vm696, %v243, 0
      %v737 = vsel %vm696, %v247, 0
      %v740 = vsel %vm696, %v251, 0
      %v743 = vsel %vm696, %v255, 0
      %v746 = vsel %vm696, %v259, 0
      %v749 = vsel %vm696, %v263, 0
      %v752 = vsel %vm696, %v267, 0
      %v755 = vsel %vm696, %v271, 0
      %v758 = vsel %vm696, %v275, 0
      %v761 = vsel %vm696, %v279, 0
      %v764 = vsel %vm696, %v283, 0
      %v767 = vsel %vm696, %v287, 0
      %v770 = vsel %vm696, %v291, 0
      %v773 = vsel %vm696, %v295, 0
      %v776 = vsel %vm696, %v299, 0
      %v779 = vsel %vm696, %v303, 0
      %v782 = vsel %vm696, %v307, 0
      %v785 = vsel %vm696, %v311, 0
      %v788 = vsel %vm696, %v315, 0
      %v791 = vsel %vm696, %v319, 0
      %v794 = vsel %vm696, %v323, 0
      %v797 = vsel %vm696, %v327, 0
      %v800 = vsel %vm696, %v331, 0
      %v803 = vsel %vm696, %v335, 0
      %v806 = vsel %vm696, %v339, 0
      %v809 = vsel %vm696, %v343, 0
      %v812 = vsel %vm696, %v347, 0
      %v815 = vsel %vm696, %v351, 0
      %v818 = vsel %vm696, %v355, 0
      %v821 = vsel %vm696, %v359, 0
      %v824 = vsel %vm696, %v363, 0
      %v827 = vsel %vm696, %v367, 0
      %v830 = vsel %vm696, %v371, 0
      %v833 = vsel %vm696, %v375, 0
      %v836 = vsel %vm696, %v379, 0
      %v839 = vsel %vm696, %v383, 0
      %v842 = vsel %vm696, %v387, 0
      %v845 = vsel %vm696, %v391, 0
      %v848 = vsel %vm696, %v395, 0
      %v851 = vsel %vm696, %v399, 0
      %v854 = vsel %vm696, %v403, 0
      %v857 = vsel %vm696, %v407, 0
      %v860 = vsel %vm696, %v411, 0
      %v863 = vsel %vm696, %v415, 0
      %v866 = vsel %vm696, %v419, 0
      %v869 = vsel %vm696, %v423, 0
      %v872 = vsel %vm696, %v427, 0
      %v875 = vsel %vm696, %v431, 0
      %v878 = vsel %vm696, %v435, 0
      %v881 = vsel %vm696, %v439, 0
      %v884 = vsel %vm696, %v443, 0
      %v887 = vsel %vm696, %v447, 0
      %v890 = vsel %vm696, %v451, 0
      %v893 = vsel %vm696, %v455, 0
      %v896 = vsel %vm696, %v459, 0
      %v899 = vsel %vm696, %v463, 0
      %v902 = vsel %vm696, %v467, 0
      %v905 = vsel %vm696, %v471, 0
      %v908 = vsel %vm696, %v475, 0
      %v911 = vsel %vm696, %v479, 0
      %v914 = vsel %vm696, %v483, 0
      %v917 = vsel %vm696, %v487, 0
      %v920 = vsel %vm696, %v491, 0
      %v923 = vsel %vm696, %v495, 0
      %v926 = vsel %vm696, %v499, 0
      %v929 = vsel %vm696, %v503, 0
      %v932 = vsel %vm696, %v507, 0
      %v935 = vsel %vm696, %v511, 0
      %v938 = vsel %vm696, %v515, 0
      %v941 = vsel %vm696, %v519, 0
      %v944 = vsel %vm696, %v523, 0
      %v947 = vsel %vm696, %v527, 0
      %v950 = vsel %vm696, %v531, 0
      %v953 = vsel %vm696, %v535, 0
      %v956 = vsel %vm696, %v539, 0
      %v959 = vsel %vm696, %v543, 0
      %v962 = vsel %vm696, %v547, 0
      %v965 = vsel %vm696, %v551, 0
      %v968 = vsel %vm696, %v555, 0
      %v971 = vsel %vm696, %v559, 0
      %v974 = vsel %vm696, %v563, 0
      %v977 = vsel %vm696, %v567, 0
      %v980 = vsel %vm696, %v571, 0
      %v983 = vsel %vm696, %v575, 0
      %v986 = vsel %vm696, %v579, 0
      %v989 = vsel %vm696, %v583, 0
      %v992 = vsel %vm696, %v587, 0
      %v995 = vsel %vm696, %v591, 0
      %v998 = vsel %vm696, %v595, 0
      %v1001 = vsel %vm696, %v599, 0
      %v1004 = vsel %vm696, %v603, 0
      %v1007 = vsel %vm696, %v607, 0
      %v1010 = vsel %vm696, %v611, 0
      %v1013 = vsel %vm696, %v615, 0
      %v1016 = vsel %vm696, %v619, 0
      %v1019 = vsel %vm696, %v623, 0
      %v1022 = vsel %vm696, %v627, 0
      %v1025 = vsel %vm696, %v631, 0
      %v1028 = vsel %vm696, %v635, 0
      %v1031 = vsel %vm696, %v639, 0
      %1033 = vmatpush.msra.mxu0 %v655
      %1034 = vmatpush.msra.mxu0 %v654
      %1035 = vmatpush.msra.mxu0 %v653
      %1036 = vmatpush.msra.mxu0 %v652
      %1037 = vmatpush.msra.mxu0 %v651
      %1038 = vmatpush.msra.mxu0 %v650
      %1039 = vmatpush.msra.mxu0 %v649
      %1040 = vmatpush.msra.mxu0 %v648
      %1041 = vmatpush.msra.mxu0 %v647
      %1042 = vmatpush.msra.mxu0 %v646
      %1043 = vmatpush.msra.mxu0 %v645
      %1044 = vmatpush.msra.mxu0 %v644
      %1045 = vmatpush.msra.mxu0 %v643
      %1046 = vmatpush.msra.mxu0 %v642
      %1047 = vmatpush.msra.mxu0 %v641
      %1048 = vmatpush.msra.mxu0 %v640
      %1049 = vmatmul.f32.gmra.mxu0 %v192
      %v1050 = vpop.f32.mrf.mxu0
      %v1051 = vadd.f32 0.0, %v1050
      %1052 = vmatmul.f32.gmra.mxu0 %v196
      %v1053 = vpop.f32.mrf.mxu0
      %v1054 = vadd.f32 0.0, %v1053
      %1055 = vmatmul.f32.gmra.mxu0 %v200
      %v1056 = vpop.f32.mrf.mxu0
      %v1057 = vadd.f32 0.0, %v1056
      %1058 = vmatmul.f32.gmra.mxu0 %v204
      %v1059 = vpop.f32.mrf.mxu0
      %v1060 = vadd.f32 0.0, %v1059
      %1061 = vmatmul.f32.gmra.mxu0 %v208
      %v1062 = vpop.f32.mrf.mxu0
      %v1063 = vadd.f32 0.0, %v1062
      %1064 = vmatmul.f32.gmra.mxu0 %v212
      %v1065 = vpop.f32.mrf.mxu0
      %v1066 = vadd.f32 0.0, %v1065
      %1067 = vmatmul.f32.gmra.mxu0 %v216
      %v1068 = vpop.f32.mrf.mxu0
      %v1069 = vadd.f32 0.0, %v1068
      %1070 = vmatmul.f32.gmra.mxu0 %v220
      %v1071 = vpop.f32.mrf.mxu0
      %v1072 = vadd.f32 0.0, %v1071
      %1073 = vmatmul.f32.gmra.mxu0 %v224
      %v1074 = vpop.f32.mrf.mxu0
      %v1075 = vadd.f32 0.0, %v1074
      %1076 = vmatmul.f32.gmra.mxu0 %v228
      %v1077 = vpop.f32.mrf.mxu0
      %v1078 = vadd.f32 0.0, %v1077
      %1079 = vmatmul.f32.gmra.mxu0 %v232
      %v1080 = vpop.f32.mrf.mxu0
      %v1081 = vadd.f32 0.0, %v1080
      %1082 = vmatmul.f32.gmra.mxu0 %v236
      %v1083 = vpop.f32.mrf.mxu0
      %v1084 = vadd.f32 0.0, %v1083
      %1085 = vmatmul.f32.gmra.mxu0 %v240
      %v1086 = vpop.f32.mrf.mxu0
      %v1087 = vadd.f32 0.0, %v1086
      %1088 = vmatmul.f32.gmra.mxu0 %v244
      %v1089 = vpop.f32.mrf.mxu0
      %v1090 = vadd.f32 0.0, %v1089
      %1091 = vmatmul.f32.gmra.mxu0 %v248
      %v1092 = vpop.f32.mrf.mxu0
      %v1093 = vadd.f32 0.0, %v1092
      %1094 = vmatmul.f32.gmra.mxu0 %v252
      %v1095 = vpop.f32.mrf.mxu0
      %v1096 = vadd.f32 0.0, %v1095
      %1097 = vmatmul.f32.gmra.mxu0 %v256
      %v1098 = vpop.f32.mrf.mxu0
      %v1099 = vadd.f32 0.0, %v1098
      %1100 = vmatmul.f32.gmra.mxu0 %v260
      %v1101 = vpop.f32.mrf.mxu0
      %v1102 = vadd.f32 0.0, %v1101
      %1103 = vmatmul.f32.gmra.mxu0 %v264
      %v1104 = vpop.f32.mrf.mxu0
      %v1105 = vadd.f32 0.0, %v1104
      %1106 = vmatmul.f32.gmra.mxu0 %v268
      %v1107 = vpop.f32.mrf.mxu0
      %v1108 = vadd.f32 0.0, %v1107
      %1109 = vmatmul.f32.gmra.mxu0 %v272
      %v1110 = vpop.f32.mrf.mxu0
      %v1111 = vadd.f32 0.0, %v1110
      %1112 = vmatmul.f32.gmra.mxu0 %v276
      %v1113 = vpop.f32.mrf.mxu0
      %v1114 = vadd.f32 0.0, %v1113
      %1115 = vmatmul.f32.gmra.mxu0 %v280
      %v1116 = vpop.f32.mrf.mxu0
      %v1117 = vadd.f32 0.0, %v1116
      %1118 = vmatmul.f32.gmra.mxu0 %v284
      %v1119 = vpop.f32.mrf.mxu0
      %v1120 = vadd.f32 0.0, %v1119
      %1121 = vmatmul.f32.gmra.mxu0 %v288
      %v1122 = vpop.f32.mrf.mxu0
      %v1123 = vadd.f32 0.0, %v1122
      %1124 = vmatmul.f32.gmra.mxu0 %v292
      %v1125 = vpop.f32.mrf.mxu0
      %v1126 = vadd.f32 0.0, %v1125
      %1127 = vmatmul.f32.gmra.mxu0 %v296
      %v1128 = vpop.f32.mrf.mxu0
      %v1129 = vadd.f32 0.0, %v1128
      %1130 = vmatmul.f32.gmra.mxu0 %v300
      %v1131 = vpop.f32.mrf.mxu0
      %v1132 = vadd.f32 0.0, %v1131
      %1133 = vmatmul.f32.gmra.mxu0 %v304
      %v1134 = vpop.f32.mrf.mxu0
      %v1135 = vadd.f32 0.0, %v1134
      %1136 = vmatmul.f32.gmra.mxu0 %v308
      %v1137 = vpop.f32.mrf.mxu0
      %v1138 = vadd.f32 0.0, %v1137
      %1139 = vmatmul.f32.gmra.mxu0 %v312
      %v1140 = vpop.f32.mrf.mxu0
      %v1141 = vadd.f32 0.0, %v1140
      %1142 = vmatmul.f32.gmra.mxu0 %v316
      %v1143 = vpop.f32.mrf.mxu0
      %v1144 = vadd.f32 0.0, %v1143
      %1145 = vmatmul.f32.gmra.mxu0 %v320
      %v1146 = vpop.f32.mrf.mxu0
      %v1147 = vadd.f32 0.0, %v1146
      %1148 = vmatmul.f32.gmra.mxu0 %v324
      %v1149 = vpop.f32.mrf.mxu0
      %v1150 = vadd.f32 0.0, %v1149
      %1151 = vmatmul.f32.gmra.mxu0 %v328
      %v1152 = vpop.f32.mrf.mxu0
      %v1153 = vadd.f32 0.0, %v1152
      %1154 = vmatmul.f32.gmra.mxu0 %v332
      %v1155 = vpop.f32.mrf.mxu0
      %v1156 = vadd.f32 0.0, %v1155
      %1157 = vmatmul.f32.gmra.mxu0 %v336
      %v1158 = vpop.f32.mrf.mxu0
      %v1159 = vadd.f32 0.0, %v1158
      %1160 = vmatmul.f32.gmra.mxu0 %v340
      %v1161 = vpop.f32.mrf.mxu0
      %v1162 = vadd.f32 0.0, %v1161
      %1163 = vmatmul.f32.gmra.mxu0 %v344
      %v1164 = vpop.f32.mrf.mxu0
      %v1165 = vadd.f32 0.0, %v1164
      %1166 = vmatmul.f32.gmra.mxu0 %v348
      %v1167 = vpop.f32.mrf.mxu0
      %v1168 = vadd.f32 0.0, %v1167
      %1169 = vmatmul.f32.gmra.mxu0 %v352
      %v1170 = vpop.f32.mrf.mxu0
      %v1171 = vadd.f32 0.0, %v1170
      %1172 = vmatmul.f32.gmra.mxu0 %v356
      %v1173 = vpop.f32.mrf.mxu0
      %v1174 = vadd.f32 0.0, %v1173
      %1175 = vmatmul.f32.gmra.mxu0 %v360
      %v1176 = vpop.f32.mrf.mxu0
      %v1177 = vadd.f32 0.0, %v1176
      %1178 = vmatmul.f32.gmra.mxu0 %v364
      %v1179 = vpop.f32.mrf.mxu0
      %v1180 = vadd.f32 0.0, %v1179
      %1181 = vmatmul.f32.gmra.mxu0 %v368
      %v1182 = vpop.f32.mrf.mxu0
      %v1183 = vadd.f32 0.0, %v1182
      %1184 = vmatmul.f32.gmra.mxu0 %v372
      %v1185 = vpop.f32.mrf.mxu0
      %v1186 = vadd.f32 0.0, %v1185
      %1187 = vmatmul.f32.gmra.mxu0 %v376
      %v1188 = vpop.f32.mrf.mxu0
      %v1189 = vadd.f32 0.0, %v1188
      %1190 = vmatmul.f32.gmra.mxu0 %v380
      %v1191 = vpop.f32.mrf.mxu0
      %v1192 = vadd.f32 0.0, %v1191
      %1193 = vmatmul.f32.gmra.mxu0 %v384
      %v1194 = vpop.f32.mrf.mxu0
      %v1195 = vadd.f32 0.0, %v1194
      %1196 = vmatmul.f32.gmra.mxu0 %v388
      %v1197 = vpop.f32.mrf.mxu0
      %v1198 = vadd.f32 0.0, %v1197
      %1199 = vmatmul.f32.gmra.mxu0 %v392
      %v1200 = vpop.f32.mrf.mxu0
      %v1201 = vadd.f32 0.0, %v1200
      %1202 = vmatmul.f32.gmra.mxu0 %v396
      %v1203 = vpop.f32.mrf.mxu0
      %v1204 = vadd.f32 0.0, %v1203
      %1205 = vmatmul.f32.gmra.mxu0 %v400
      %v1206 = vpop.f32.mrf.mxu0
      %v1207 = vadd.f32 0.0, %v1206
      %1208 = vmatmul.f32.gmra.mxu0 %v404
      %v1209 = vpop.f32.mrf.mxu0
      %v1210 = vadd.f32 0.0, %v1209
      %1211 = vmatmul.f32.gmra.mxu0 %v408
      %v1212 = vpop.f32.mrf.mxu0
      %v1213 = vadd.f32 0.0, %v1212
      %1214 = vmatmul.f32.gmra.mxu0 %v412
      %v1215 = vpop.f32.mrf.mxu0
      %v1216 = vadd.f32 0.0, %v1215
      %1217 = vmatmul.f32.gmra.mxu0 %v416
      %v1218 = vpop.f32.mrf.mxu0
      %v1219 = vadd.f32 0.0, %v1218
      %1220 = vmatmul.f32.gmra.mxu0 %v420
      %v1221 = vpop.f32.mrf.mxu0
      %v1222 = vadd.f32 0.0, %v1221
      %1223 = vmatmul.f32.gmra.mxu0 %v424
      %v1224 = vpop.f32.mrf.mxu0
      %v1225 = vadd.f32 0.0, %v1224
      %1226 = vmatmul.f32.gmra.mxu0 %v428
      %v1227 = vpop.f32.mrf.mxu0
      %v1228 = vadd.f32 0.0, %v1227
      %1229 = vmatmul.f32.gmra.mxu0 %v432
      %v1230 = vpop.f32.mrf.mxu0
      %v1231 = vadd.f32 0.0, %v1230
      %1232 = vmatmul.f32.gmra.mxu0 %v436
      %v1233 = vpop.f32.mrf.mxu0
      %v1234 = vadd.f32 0.0, %v1233
      %1235 = vmatmul.f32.gmra.mxu0 %v440
      %v1236 = vpop.f32.mrf.mxu0
      %v1237 = vadd.f32 0.0, %v1236
      %1238 = vmatmul.f32.gmra.mxu0 %v444
      %v1239 = vpop.f32.mrf.mxu0
      %v1240 = vadd.f32 0.0, %v1239
      %1241 = vmatmul.f32.gmra.mxu0 %v448
      %v1242 = vpop.f32.mrf.mxu0
      %v1243 = vadd.f32 0.0, %v1242
      %1244 = vmatmul.f32.gmra.mxu0 %v452
      %v1245 = vpop.f32.mrf.mxu0
      %v1246 = vadd.f32 0.0, %v1245
      %1247 = vmatmul.f32.gmra.mxu0 %v456
      %v1248 = vpop.f32.mrf.mxu0
      %v1249 = vadd.f32 0.0, %v1248
      %1250 = vmatmul.f32.gmra.mxu0 %v460
      %v1251 = vpop.f32.mrf.mxu0
      %v1252 = vadd.f32 0.0, %v1251
      %1253 = vmatmul.f32.gmra.mxu0 %v464
      %v1254 = vpop.f32.mrf.mxu0
      %v1255 = vadd.f32 0.0, %v1254
      %1256 = vmatmul.f32.gmra.mxu0 %v468
      %v1257 = vpop.f32.mrf.mxu0
      %v1258 = vadd.f32 0.0, %v1257
      %1259 = vmatmul.f32.gmra.mxu0 %v472
      %v1260 = vpop.f32.mrf.mxu0
      %v1261 = vadd.f32 0.0, %v1260
      %1262 = vmatmul.f32.gmra.mxu0 %v476
      %v1263 = vpop.f32.mrf.mxu0
      %v1264 = vadd.f32 0.0, %v1263
      %1265 = vmatmul.f32.gmra.mxu0 %v480
      %v1266 = vpop.f32.mrf.mxu0
      %v1267 = vadd.f32 0.0, %v1266
      %1268 = vmatmul.f32.gmra.mxu0 %v484
      %v1269 = vpop.f32.mrf.mxu0
      %v1270 = vadd.f32 0.0, %v1269
      %1271 = vmatmul.f32.gmra.mxu0 %v488
      %v1272 = vpop.f32.mrf.mxu0
      %v1273 = vadd.f32 0.0, %v1272
      %1274 = vmatmul.f32.gmra.mxu0 %v492
      %v1275 = vpop.f32.mrf.mxu0
      %v1276 = vadd.f32 0.0, %v1275
      %1277 = vmatmul.f32.gmra.mxu0 %v496
      %v1278 = vpop.f32.mrf.mxu0
      %v1279 = vadd.f32 0.0, %v1278
      %1280 = vmatmul.f32.gmra.mxu0 %v500
      %v1281 = vpop.f32.mrf.mxu0
      %v1282 = vadd.f32 0.0, %v1281
      %1283 = vmatmul.f32.gmra.mxu0 %v504
      %v1284 = vpop.f32.mrf.mxu0
      %v1285 = vadd.f32 0.0, %v1284
      %1286 = vmatmul.f32.gmra.mxu0 %v508
      %v1287 = vpop.f32.mrf.mxu0
      %v1288 = vadd.f32 0.0, %v1287
      %1289 = vmatmul.f32.gmra.mxu0 %v512
      %v1290 = vpop.f32.mrf.mxu0
      %v1291 = vadd.f32 0.0, %v1290
      %1292 = vmatmul.f32.gmra.mxu0 %v516
      %v1293 = vpop.f32.mrf.mxu0
      %v1294 = vadd.f32 0.0, %v1293
      %1295 = vmatmul.f32.gmra.mxu0 %v520
      %v1296 = vpop.f32.mrf.mxu0
      %v1297 = vadd.f32 0.0, %v1296
      %1298 = vmatmul.f32.gmra.mxu0 %v524
      %v1299 = vpop.f32.mrf.mxu0
      %v1300 = vadd.f32 0.0, %v1299
      %1301 = vmatmul.f32.gmra.mxu0 %v528
      %v1302 = vpop.f32.mrf.mxu0
      %v1303 = vadd.f32 0.0, %v1302
      %1304 = vmatmul.f32.gmra.mxu0 %v532
      %v1305 = vpop.f32.mrf.mxu0
      %v1306 = vadd.f32 0.0, %v1305
      %1307 = vmatmul.f32.gmra.mxu0 %v536
      %v1308 = vpop.f32.mrf.mxu0
      %v1309 = vadd.f32 0.0, %v1308
      %1310 = vmatmul.f32.gmra.mxu0 %v540
      %v1311 = vpop.f32.mrf.mxu0
      %v1312 = vadd.f32 0.0, %v1311
      %1313 = vmatmul.f32.gmra.mxu0 %v544
      %v1314 = vpop.f32.mrf.mxu0
      %v1315 = vadd.f32 0.0, %v1314
      %1316 = vmatmul.f32.gmra.mxu0 %v548
      %v1317 = vpop.f32.mrf.mxu0
      %v1318 = vadd.f32 0.0, %v1317
      %1319 = vmatmul.f32.gmra.mxu0 %v552
      %v1320 = vpop.f32.mrf.mxu0
      %v1321 = vadd.f32 0.0, %v1320
      %1322 = vmatmul.f32.gmra.mxu0 %v556
      %v1323 = vpop.f32.mrf.mxu0
      %v1324 = vadd.f32 0.0, %v1323
      %1325 = vmatmul.f32.gmra.mxu0 %v560
      %v1326 = vpop.f32.mrf.mxu0
      %v1327 = vadd.f32 0.0, %v1326
      %1328 = vmatmul.f32.gmra.mxu0 %v564
      %v1329 = vpop.f32.mrf.mxu0
      %v1330 = vadd.f32 0.0, %v1329
      %1331 = vmatmul.f32.gmra.mxu0 %v568
      %v1332 = vpop.f32.mrf.mxu0
      %v1333 = vadd.f32 0.0, %v1332
      %1334 = vmatmul.f32.gmra.mxu0 %v572
      %v1335 = vpop.f32.mrf.mxu0
      %v1336 = vadd.f32 0.0, %v1335
      %1337 = vmatmul.f32.gmra.mxu0 %v576
      %v1338 = vpop.f32.mrf.mxu0
      %v1339 = vadd.f32 0.0, %v1338
      %1340 = vmatmul.f32.gmra.mxu0 %v580
      %v1341 = vpop.f32.mrf.mxu0
      %v1342 = vadd.f32 0.0, %v1341
      %1343 = vmatmul.f32.gmra.mxu0 %v584
      %v1344 = vpop.f32.mrf.mxu0
      %v1345 = vadd.f32 0.0, %v1344
      %1346 = vmatmul.f32.gmra.mxu0 %v588
      %v1347 = vpop.f32.mrf.mxu0
      %v1348 = vadd.f32 0.0, %v1347
      %1349 = vmatmul.f32.gmra.mxu0 %v592
      %v1350 = vpop.f32.mrf.mxu0
      %v1351 = vadd.f32 0.0, %v1350
      %1352 = vmatmul.f32.gmra.mxu0 %v596
      %v1353 = vpop.f32.mrf.mxu0
      %v1354 = vadd.f32 0.0, %v1353
      %1355 = vmatmul.f32.gmra.mxu0 %v600
      %v1356 = vpop.f32.mrf.mxu0
      %v1357 = vadd.f32 0.0, %v1356
      %1358 = vmatmul.f32.gmra.mxu0 %v604
      %v1359 = vpop.f32.mrf.mxu0
      %v1360 = vadd.f32 0.0, %v1359
      %1361 = vmatmul.f32.gmra.mxu0 %v608
      %v1362 = vpop.f32.mrf.mxu0
      %v1363 = vadd.f32 0.0, %v1362
      %1364 = vmatmul.f32.gmra.mxu0 %v612
      %v1365 = vpop.f32.mrf.mxu0
      %v1366 = vadd.f32 0.0, %v1365
      %1367 = vmatmul.f32.gmra.mxu0 %v616
      %v1368 = vpop.f32.mrf.mxu0
      %v1369 = vadd.f32 0.0, %v1368
      %1370 = vmatmul.f32.gmra.mxu0 %v620
      %v1371 = vpop.f32.mrf.mxu0
      %v1372 = vadd.f32 0.0, %v1371
      %1373 = vmatmul.f32.gmra.mxu0 %v624
      %v1374 = vpop.f32.mrf.mxu0
      %v1375 = vadd.f32 0.0, %v1374
      %1376 = vmatmul.f32.gmra.mxu0 %v628
      %v1377 = vpop.f32.mrf.mxu0
      %v1378 = vadd.f32 0.0, %v1377
      %1379 = vmatmul.f32.gmra.mxu0 %v632
      %v1380 = vpop.f32.mrf.mxu0
      %v1381 = vadd.f32 0.0, %v1380
      %1382 = vmatmul.f32.gmra.mxu0 %v636
      %v1383 = vpop.f32.mrf.mxu0
      %v1384 = vadd.f32 0.0, %v1383
      %1385 = vdwg.mxu0
      %1386 = vmatpush.msra.mxu0 %v671
      %1387 = vmatpush.msra.mxu0 %v670
      %1388 = vmatpush.msra.mxu0 %v669
      %1389 = vmatpush.msra.mxu0 %v668
      %1390 = vmatpush.msra.mxu0 %v667
      %1391 = vmatpush.msra.mxu0 %v666
      %1392 = vmatpush.msra.mxu0 %v665
      %1393 = vmatpush.msra.mxu0 %v664
      %1394 = vmatpush.msra.mxu0 %v663
      %1395 = vmatpush.msra.mxu0 %v662
      %1396 = vmatpush.msra.mxu0 %v661
      %1397 = vmatpush.msra.mxu0 %v660
      %1398 = vmatpush.msra.mxu0 %v659
      %1399 = vmatpush.msra.mxu0 %v658
      %1400 = vmatpush.msra.mxu0 %v657
      %1401 = vmatpush.msra.mxu0 %v656
      %1402 = vmatmul.f32.gmra.mxu0 %v193
      %v1403 = vpop.f32.mrf.mxu0
      %v1404 = vadd.f32 %v1051, %v1403
      %1405 = vmatmul.f32.gmra.mxu0 %v197
      %v1406 = vpop.f32.mrf.mxu0
      %v1407 = vadd.f32 %v1054, %v1406
      %1408 = vmatmul.f32.gmra.mxu0 %v201
      %v1409 = vpop.f32.mrf.mxu0
      %v1410 = vadd.f32 %v1057, %v1409
      %1411 = vmatmul.f32.gmra.mxu0 %v205
      %v1412 = vpop.f32.mrf.mxu0
      %v1413 = vadd.f32 %v1060, %v1412
      %1414 = vmatmul.f32.gmra.mxu0 %v209
      %v1415 = vpop.f32.mrf.mxu0
      %v1416 = vadd.f32 %v1063, %v1415
      %1417 = vmatmul.f32.gmra.mxu0 %v213
      %v1418 = vpop.f32.mrf.mxu0
      %v1419 = vadd.f32 %v1066, %v1418
      %1420 = vmatmul.f32.gmra.mxu0 %v217
      %v1421 = vpop.f32.mrf.mxu0
      %v1422 = vadd.f32 %v1069, %v1421
      %1423 = vmatmul.f32.gmra.mxu0 %v221
      %v1424 = vpop.f32.mrf.mxu0
      %v1425 = vadd.f32 %v1072, %v1424
      %1426 = vmatmul.f32.gmra.mxu0 %v225
      %v1427 = vpop.f32.mrf.mxu0
      %v1428 = vadd.f32 %v1075, %v1427
      %1429 = vmatmul.f32.gmra.mxu0 %v229
      %v1430 = vpop.f32.mrf.mxu0
      %v1431 = vadd.f32 %v1078, %v1430
      %1432 = vmatmul.f32.gmra.mxu0 %v233
      %v1433 = vpop.f32.mrf.mxu0
      %v1434 = vadd.f32 %v1081, %v1433
      %1435 = vmatmul.f32.gmra.mxu0 %v237
      %v1436 = vpop.f32.mrf.mxu0
      %v1437 = vadd.f32 %v1084, %v1436
      %1438 = vmatmul.f32.gmra.mxu0 %v241
      %v1439 = vpop.f32.mrf.mxu0
      %v1440 = vadd.f32 %v1087, %v1439
      %1441 = vmatmul.f32.gmra.mxu0 %v245
      %v1442 = vpop.f32.mrf.mxu0
      %v1443 = vadd.f32 %v1090, %v1442
      %1444 = vmatmul.f32.gmra.mxu0 %v249
      %v1445 = vpop.f32.mrf.mxu0
      %v1446 = vadd.f32 %v1093, %v1445
      %1447 = vmatmul.f32.gmra.mxu0 %v253
      %v1448 = vpop.f32.mrf.mxu0
      %v1449 = vadd.f32 %v1096, %v1448
      %1450 = vmatmul.f32.gmra.mxu0 %v257
      %v1451 = vpop.f32.mrf.mxu0
      %v1452 = vadd.f32 %v1099, %v1451
      %1453 = vmatmul.f32.gmra.mxu0 %v261
      %v1454 = vpop.f32.mrf.mxu0
      %v1455 = vadd.f32 %v1102, %v1454
      %1456 = vmatmul.f32.gmra.mxu0 %v265
      %v1457 = vpop.f32.mrf.mxu0
      %v1458 = vadd.f32 %v1105, %v1457
      %1459 = vmatmul.f32.gmra.mxu0 %v269
      %v1460 = vpop.f32.mrf.mxu0
      %v1461 = vadd.f32 %v1108, %v1460
      %1462 = vmatmul.f32.gmra.mxu0 %v273
      %v1463 = vpop.f32.mrf.mxu0
      %v1464 = vadd.f32 %v1111, %v1463
      %1465 = vmatmul.f32.gmra.mxu0 %v277
      %v1466 = vpop.f32.mrf.mxu0
      %v1467 = vadd.f32 %v1114, %v1466
      %1468 = vmatmul.f32.gmra.mxu0 %v281
      %v1469 = vpop.f32.mrf.mxu0
      %v1470 = vadd.f32 %v1117, %v1469
      %1471 = vmatmul.f32.gmra.mxu0 %v285
      %v1472 = vpop.f32.mrf.mxu0
      %v1473 = vadd.f32 %v1120, %v1472
      %1474 = vmatmul.f32.gmra.mxu0 %v289
      %v1475 = vpop.f32.mrf.mxu0
      %v1476 = vadd.f32 %v1123, %v1475
      %1477 = vmatmul.f32.gmra.mxu0 %v293
      %v1478 = vpop.f32.mrf.mxu0
      %v1479 = vadd.f32 %v1126, %v1478
      %1480 = vmatmul.f32.gmra.mxu0 %v297
      %v1481 = vpop.f32.mrf.mxu0
      %v1482 = vadd.f32 %v1129, %v1481
      %1483 = vmatmul.f32.gmra.mxu0 %v301
      %v1484 = vpop.f32.mrf.mxu0
      %v1485 = vadd.f32 %v1132, %v1484
      %1486 = vmatmul.f32.gmra.mxu0 %v305
      %v1487 = vpop.f32.mrf.mxu0
      %v1488 = vadd.f32 %v1135, %v1487
      %1489 = vmatmul.f32.gmra.mxu0 %v309
      %v1490 = vpop.f32.mrf.mxu0
      %v1491 = vadd.f32 %v1138, %v1490
      %1492 = vmatmul.f32.gmra.mxu0 %v313
      %v1493 = vpop.f32.mrf.mxu0
      %v1494 = vadd.f32 %v1141, %v1493
      %1495 = vmatmul.f32.gmra.mxu0 %v317
      %v1496 = vpop.f32.mrf.mxu0
      %v1497 = vadd.f32 %v1144, %v1496
      %1498 = vmatmul.f32.gmra.mxu0 %v321
      %v1499 = vpop.f32.mrf.mxu0
      %v1500 = vadd.f32 %v1147, %v1499
      %1501 = vmatmul.f32.gmra.mxu0 %v325
      %v1502 = vpop.f32.mrf.mxu0
      %v1503 = vadd.f32 %v1150, %v1502
      %1504 = vmatmul.f32.gmra.mxu0 %v329
      %v1505 = vpop.f32.mrf.mxu0
      %v1506 = vadd.f32 %v1153, %v1505
      %1507 = vmatmul.f32.gmra.mxu0 %v333
      %v1508 = vpop.f32.mrf.mxu0
      %v1509 = vadd.f32 %v1156, %v1508
      %1510 = vmatmul.f32.gmra.mxu0 %v337
      %v1511 = vpop.f32.mrf.mxu0
      %v1512 = vadd.f32 %v1159, %v1511
      %1513 = vmatmul.f32.gmra.mxu0 %v341
      %v1514 = vpop.f32.mrf.mxu0
      %v1515 = vadd.f32 %v1162, %v1514
      %1516 = vmatmul.f32.gmra.mxu0 %v345
      %v1517 = vpop.f32.mrf.mxu0
      %v1518 = vadd.f32 %v1165, %v1517
      %1519 = vmatmul.f32.gmra.mxu0 %v349
      %v1520 = vpop.f32.mrf.mxu0
      %v1521 = vadd.f32 %v1168, %v1520
      %1522 = vmatmul.f32.gmra.mxu0 %v353
      %v1523 = vpop.f32.mrf.mxu0
      %v1524 = vadd.f32 %v1171, %v1523
      %1525 = vmatmul.f32.gmra.mxu0 %v357
      %v1526 = vpop.f32.mrf.mxu0
      %v1527 = vadd.f32 %v1174, %v1526
      %1528 = vmatmul.f32.gmra.mxu0 %v361
      %v1529 = vpop.f32.mrf.mxu0
      %v1530 = vadd.f32 %v1177, %v1529
      %1531 = vmatmul.f32.gmra.mxu0 %v365
      %v1532 = vpop.f32.mrf.mxu0
      %v1533 = vadd.f32 %v1180, %v1532
      %1534 = vmatmul.f32.gmra.mxu0 %v369
      %v1535 = vpop.f32.mrf.mxu0
      %v1536 = vadd.f32 %v1183, %v1535
      %1537 = vmatmul.f32.gmra.mxu0 %v373
      %v1538 = vpop.f32.mrf.mxu0
      %v1539 = vadd.f32 %v1186, %v1538
      %1540 = vmatmul.f32.gmra.mxu0 %v377
      %v1541 = vpop.f32.mrf.mxu0
      %v1542 = vadd.f32 %v1189, %v1541
      %1543 = vmatmul.f32.gmra.mxu0 %v381
      %v1544 = vpop.f32.mrf.mxu0
      %v1545 = vadd.f32 %v1192, %v1544
      %1546 = vmatmul.f32.gmra.mxu0 %v385
      %v1547 = vpop.f32.mrf.mxu0
      %v1548 = vadd.f32 %v1195, %v1547
      %1549 = vmatmul.f32.gmra.mxu0 %v389
      %v1550 = vpop.f32.mrf.mxu0
      %v1551 = vadd.f32 %v1198, %v1550
      %1552 = vmatmul.f32.gmra.mxu0 %v393
      %v1553 = vpop.f32.mrf.mxu0
      %v1554 = vadd.f32 %v1201, %v1553
      %1555 = vmatmul.f32.gmra.mxu0 %v397
      %v1556 = vpop.f32.mrf.mxu0
      %v1557 = vadd.f32 %v1204, %v1556
      %1558 = vmatmul.f32.gmra.mxu0 %v401
      %v1559 = vpop.f32.mrf.mxu0
      %v1560 = vadd.f32 %v1207, %v1559
      %1561 = vmatmul.f32.gmra.mxu0 %v405
      %v1562 = vpop.f32.mrf.mxu0
      %v1563 = vadd.f32 %v1210, %v1562
      %1564 = vmatmul.f32.gmra.mxu0 %v409
      %v1565 = vpop.f32.mrf.mxu0
      %v1566 = vadd.f32 %v1213, %v1565
      %1567 = vmatmul.f32.gmra.mxu0 %v413
      %v1568 = vpop.f32.mrf.mxu0
      %v1569 = vadd.f32 %v1216, %v1568
      %1570 = vmatmul.f32.gmra.mxu0 %v417
      %v1571 = vpop.f32.mrf.mxu0
      %v1572 = vadd.f32 %v1219, %v1571
      %1573 = vmatmul.f32.gmra.mxu0 %v421
      %v1574 = vpop.f32.mrf.mxu0
      %v1575 = vadd.f32 %v1222, %v1574
      %1576 = vmatmul.f32.gmra.mxu0 %v425
      %v1577 = vpop.f32.mrf.mxu0
      %v1578 = vadd.f32 %v1225, %v1577
      %1579 = vmatmul.f32.gmra.mxu0 %v429
      %v1580 = vpop.f32.mrf.mxu0
      %v1581 = vadd.f32 %v1228, %v1580
      %1582 = vmatmul.f32.gmra.mxu0 %v433
      %v1583 = vpop.f32.mrf.mxu0
      %v1584 = vadd.f32 %v1231, %v1583
      %1585 = vmatmul.f32.gmra.mxu0 %v437
      %v1586 = vpop.f32.mrf.mxu0
      %v1587 = vadd.f32 %v1234, %v1586
      %1588 = vmatmul.f32.gmra.mxu0 %v441
      %v1589 = vpop.f32.mrf.mxu0
      %v1590 = vadd.f32 %v1237, %v1589
      %1591 = vmatmul.f32.gmra.mxu0 %v445
      %v1592 = vpop.f32.mrf.mxu0
      %v1593 = vadd.f32 %v1240, %v1592
      %1594 = vmatmul.f32.gmra.mxu0 %v449
      %v1595 = vpop.f32.mrf.mxu0
      %v1596 = vadd.f32 %v1243, %v1595
      %1597 = vmatmul.f32.gmra.mxu0 %v453
      %v1598 = vpop.f32.mrf.mxu0
      %v1599 = vadd.f32 %v1246, %v1598
      %1600 = vmatmul.f32.gmra.mxu0 %v457
      %v1601 = vpop.f32.mrf.mxu0
      %v1602 = vadd.f32 %v1249, %v1601
      %1603 = vmatmul.f32.gmra.mxu0 %v461
      %v1604 = vpop.f32.mrf.mxu0
      %v1605 = vadd.f32 %v1252, %v1604
      %1606 = vmatmul.f32.gmra.mxu0 %v465
      %v1607 = vpop.f32.mrf.mxu0
      %v1608 = vadd.f32 %v1255, %v1607
      %1609 = vmatmul.f32.gmra.mxu0 %v469
      %v1610 = vpop.f32.mrf.mxu0
      %v1611 = vadd.f32 %v1258, %v1610
      %1612 = vmatmul.f32.gmra.mxu0 %v473
      %v1613 = vpop.f32.mrf.mxu0
      %v1614 = vadd.f32 %v1261, %v1613
      %1615 = vmatmul.f32.gmra.mxu0 %v477
      %v1616 = vpop.f32.mrf.mxu0
      %v1617 = vadd.f32 %v1264, %v1616
      %1618 = vmatmul.f32.gmra.mxu0 %v481
      %v1619 = vpop.f32.mrf.mxu0
      %v1620 = vadd.f32 %v1267, %v1619
      %1621 = vmatmul.f32.gmra.mxu0 %v485
      %v1622 = vpop.f32.mrf.mxu0
      %v1623 = vadd.f32 %v1270, %v1622
      %1624 = vmatmul.f32.gmra.mxu0 %v489
      %v1625 = vpop.f32.mrf.mxu0
      %v1626 = vadd.f32 %v1273, %v1625
      %1627 = vmatmul.f32.gmra.mxu0 %v493
      %v1628 = vpop.f32.mrf.mxu0
      %v1629 = vadd.f32 %v1276, %v1628
      %1630 = vmatmul.f32.gmra.mxu0 %v497
      %v1631 = vpop.f32.mrf.mxu0
      %v1632 = vadd.f32 %v1279, %v1631
      %1633 = vmatmul.f32.gmra.mxu0 %v501
      %v1634 = vpop.f32.mrf.mxu0
      %v1635 = vadd.f32 %v1282, %v1634
      %1636 = vmatmul.f32.gmra.mxu0 %v505
      %v1637 = vpop.f32.mrf.mxu0
      %v1638 = vadd.f32 %v1285, %v1637
      %1639 = vmatmul.f32.gmra.mxu0 %v509
      %v1640 = vpop.f32.mrf.mxu0
      %v1641 = vadd.f32 %v1288, %v1640
      %1642 = vmatmul.f32.gmra.mxu0 %v513
      %v1643 = vpop.f32.mrf.mxu0
      %v1644 = vadd.f32 %v1291, %v1643
      %1645 = vmatmul.f32.gmra.mxu0 %v517
      %v1646 = vpop.f32.mrf.mxu0
      %v1647 = vadd.f32 %v1294, %v1646
      %1648 = vmatmul.f32.gmra.mxu0 %v521
      %v1649 = vpop.f32.mrf.mxu0
      %v1650 = vadd.f32 %v1297, %v1649
      %1651 = vmatmul.f32.gmra.mxu0 %v525
      %v1652 = vpop.f32.mrf.mxu0
      %v1653 = vadd.f32 %v1300, %v1652
      %1654 = vmatmul.f32.gmra.mxu0 %v529
      %v1655 = vpop.f32.mrf.mxu0
      %v1656 = vadd.f32 %v1303, %v1655
      %1657 = vmatmul.f32.gmra.mxu0 %v533
      %v1658 = vpop.f32.mrf.mxu0
      %v1659 = vadd.f32 %v1306, %v1658
      %1660 = vmatmul.f32.gmra.mxu0 %v537
      %v1661 = vpop.f32.mrf.mxu0
      %v1662 = vadd.f32 %v1309, %v1661
      %1663 = vmatmul.f32.gmra.mxu0 %v541
      %v1664 = vpop.f32.mrf.mxu0
      %v1665 = vadd.f32 %v1312, %v1664
      %1666 = vmatmul.f32.gmra.mxu0 %v545
      %v1667 = vpop.f32.mrf.mxu0
      %v1668 = vadd.f32 %v1315, %v1667
      %1669 = vmatmul.f32.gmra.mxu0 %v549
      %v1670 = vpop.f32.mrf.mxu0
      %v1671 = vadd.f32 %v1318, %v1670
      %1672 = vmatmul.f32.gmra.mxu0 %v553
      %v1673 = vpop.f32.mrf.mxu0
      %v1674 = vadd.f32 %v1321, %v1673
      %1675 = vmatmul.f32.gmra.mxu0 %v557
      %v1676 = vpop.f32.mrf.mxu0
      %v1677 = vadd.f32 %v1324, %v1676
      %1678 = vmatmul.f32.gmra.mxu0 %v561
      %v1679 = vpop.f32.mrf.mxu0
      %v1680 = vadd.f32 %v1327, %v1679
      %1681 = vmatmul.f32.gmra.mxu0 %v565
      %v1682 = vpop.f32.mrf.mxu0
      %v1683 = vadd.f32 %v1330, %v1682
      %1684 = vmatmul.f32.gmra.mxu0 %v569
      %v1685 = vpop.f32.mrf.mxu0
      %v1686 = vadd.f32 %v1333, %v1685
      %1687 = vmatmul.f32.gmra.mxu0 %v573
      %v1688 = vpop.f32.mrf.mxu0
      %v1689 = vadd.f32 %v1336, %v1688
      %1690 = vmatmul.f32.gmra.mxu0 %v577
      %v1691 = vpop.f32.mrf.mxu0
      %v1692 = vadd.f32 %v1339, %v1691
      %1693 = vmatmul.f32.gmra.mxu0 %v581
      %v1694 = vpop.f32.mrf.mxu0
      %v1695 = vadd.f32 %v1342, %v1694
      %1696 = vmatmul.f32.gmra.mxu0 %v585
      %v1697 = vpop.f32.mrf.mxu0
      %v1698 = vadd.f32 %v1345, %v1697
      %1699 = vmatmul.f32.gmra.mxu0 %v589
      %v1700 = vpop.f32.mrf.mxu0
      %v1701 = vadd.f32 %v1348, %v1700
      %1702 = vmatmul.f32.gmra.mxu0 %v593
      %v1703 = vpop.f32.mrf.mxu0
      %v1704 = vadd.f32 %v1351, %v1703
      %1705 = vmatmul.f32.gmra.mxu0 %v597
      %v1706 = vpop.f32.mrf.mxu0
      %v1707 = vadd.f32 %v1354, %v1706
      %1708 = vmatmul.f32.gmra.mxu0 %v601
      %v1709 = vpop.f32.mrf.mxu0
      %v1710 = vadd.f32 %v1357, %v1709
      %1711 = vmatmul.f32.gmra.mxu0 %v605
      %v1712 = vpop.f32.mrf.mxu0
      %v1713 = vadd.f32 %v1360, %v1712
      %1714 = vmatmul.f32.gmra.mxu0 %v609
      %v1715 = vpop.f32.mrf.mxu0
      %v1716 = vadd.f32 %v1363, %v1715
      %1717 = vmatmul.f32.gmra.mxu0 %v613
      %v1718 = vpop.f32.mrf.mxu0
      %v1719 = vadd.f32 %v1366, %v1718
      %1720 = vmatmul.f32.gmra.mxu0 %v617
      %v1721 = vpop.f32.mrf.mxu0
      %v1722 = vadd.f32 %v1369, %v1721
      %1723 = vmatmul.f32.gmra.mxu0 %v621
      %v1724 = vpop.f32.mrf.mxu0
      %v1725 = vadd.f32 %v1372, %v1724
      %1726 = vmatmul.f32.gmra.mxu0 %v625
      %v1727 = vpop.f32.mrf.mxu0
      %v1728 = vadd.f32 %v1375, %v1727
      %1729 = vmatmul.f32.gmra.mxu0 %v629
      %v1730 = vpop.f32.mrf.mxu0
      %v1731 = vadd.f32 %v1378, %v1730
      %1732 = vmatmul.f32.gmra.mxu0 %v633
      %v1733 = vpop.f32.mrf.mxu0
      %v1734 = vadd.f32 %v1381, %v1733
      %1735 = vmatmul.f32.gmra.mxu0 %v637
      %v1736 = vpop.f32.mrf.mxu0
      %v1737 = vadd.f32 %v1384, %v1736
      %1738 = vdwg.mxu0
      %1739 = vmatpush.msra.mxu0 %v687
      %1740 = vmatpush.msra.mxu0 %v686
      %1741 = vmatpush.msra.mxu0 %v685
      %1742 = vmatpush.msra.mxu0 %v684
      %1743 = vmatpush.msra.mxu0 %v683
      %1744 = vmatpush.msra.mxu0 %v682
      %1745 = vmatpush.msra.mxu0 %v681
      %1746 = vmatpush.msra.mxu0 %v680
      %1747 = vmatpush.msra.mxu0 %v679
      %1748 = vmatpush.msra.mxu0 %v678
      %1749 = vmatpush.msra.mxu0 %v677
      %1750 = vmatpush.msra.mxu0 %v676
      %1751 = vmatpush.msra.mxu0 %v675
      %1752 = vmatpush.msra.mxu0 %v674
      %1753 = vmatpush.msra.mxu0 %v673
      %1754 = vmatpush.msra.mxu0 %v672
      %1755 = vmatmul.f32.gmra.mxu0 %v194
      %v1756 = vpop.f32.mrf.mxu0
      %v1757 = vadd.f32 %v1404, %v1756
      %1758 = vmatmul.f32.gmra.mxu0 %v198
      %v1759 = vpop.f32.mrf.mxu0
      %v1760 = vadd.f32 %v1407, %v1759
      %1761 = vmatmul.f32.gmra.mxu0 %v202
      %v1762 = vpop.f32.mrf.mxu0
      %v1763 = vadd.f32 %v1410, %v1762
      %1764 = vmatmul.f32.gmra.mxu0 %v206
      %v1765 = vpop.f32.mrf.mxu0
      %v1766 = vadd.f32 %v1413, %v1765
      %1767 = vmatmul.f32.gmra.mxu0 %v210
      %v1768 = vpop.f32.mrf.mxu0
      %v1769 = vadd.f32 %v1416, %v1768
      %1770 = vmatmul.f32.gmra.mxu0 %v214
      %v1771 = vpop.f32.mrf.mxu0
      %v1772 = vadd.f32 %v1419, %v1771
      %1773 = vmatmul.f32.gmra.mxu0 %v218
      %v1774 = vpop.f32.mrf.mxu0
      %v1775 = vadd.f32 %v1422, %v1774
      %1776 = vmatmul.f32.gmra.mxu0 %v222
      %v1777 = vpop.f32.mrf.mxu0
      %v1778 = vadd.f32 %v1425, %v1777
      %1779 = vmatmul.f32.gmra.mxu0 %v226
      %v1780 = vpop.f32.mrf.mxu0
      %v1781 = vadd.f32 %v1428, %v1780
      %1782 = vmatmul.f32.gmra.mxu0 %v230
      %v1783 = vpop.f32.mrf.mxu0
      %v1784 = vadd.f32 %v1431, %v1783
      %1785 = vmatmul.f32.gmra.mxu0 %v234
      %v1786 = vpop.f32.mrf.mxu0
      %v1787 = vadd.f32 %v1434, %v1786
      %1788 = vmatmul.f32.gmra.mxu0 %v238
      %v1789 = vpop.f32.mrf.mxu0
      %v1790 = vadd.f32 %v1437, %v1789
      %1791 = vmatmul.f32.gmra.mxu0 %v242
      %v1792 = vpop.f32.mrf.mxu0
      %v1793 = vadd.f32 %v1440, %v1792
      %1794 = vmatmul.f32.gmra.mxu0 %v246
      %v1795 = vpop.f32.mrf.mxu0
      %v1796 = vadd.f32 %v1443, %v1795
      %1797 = vmatmul.f32.gmra.mxu0 %v250
      %v1798 = vpop.f32.mrf.mxu0
      %v1799 = vadd.f32 %v1446, %v1798
      %1800 = vmatmul.f32.gmra.mxu0 %v254
      %v1801 = vpop.f32.mrf.mxu0
      %v1802 = vadd.f32 %v1449, %v1801
      %1803 = vmatmul.f32.gmra.mxu0 %v258
      %v1804 = vpop.f32.mrf.mxu0
      %v1805 = vadd.f32 %v1452, %v1804
      %1806 = vmatmul.f32.gmra.mxu0 %v262
      %v1807 = vpop.f32.mrf.mxu0
      %v1808 = vadd.f32 %v1455, %v1807
      %1809 = vmatmul.f32.gmra.mxu0 %v266
      %v1810 = vpop.f32.mrf.mxu0
      %v1811 = vadd.f32 %v1458, %v1810
      %1812 = vmatmul.f32.gmra.mxu0 %v270
      %v1813 = vpop.f32.mrf.mxu0
      %v1814 = vadd.f32 %v1461, %v1813
      %1815 = vmatmul.f32.gmra.mxu0 %v274
      %v1816 = vpop.f32.mrf.mxu0
      %v1817 = vadd.f32 %v1464, %v1816
      %1818 = vmatmul.f32.gmra.mxu0 %v278
      %v1819 = vpop.f32.mrf.mxu0
      %v1820 = vadd.f32 %v1467, %v1819
      %1821 = vmatmul.f32.gmra.mxu0 %v282
      %v1822 = vpop.f32.mrf.mxu0
      %v1823 = vadd.f32 %v1470, %v1822
      %1824 = vmatmul.f32.gmra.mxu0 %v286
      %v1825 = vpop.f32.mrf.mxu0
      %v1826 = vadd.f32 %v1473, %v1825
      %1827 = vmatmul.f32.gmra.mxu0 %v290
      %v1828 = vpop.f32.mrf.mxu0
      %v1829 = vadd.f32 %v1476, %v1828
      %1830 = vmatmul.f32.gmra.mxu0 %v294
      %v1831 = vpop.f32.mrf.mxu0
      %v1832 = vadd.f32 %v1479, %v1831
      %1833 = vmatmul.f32.gmra.mxu0 %v298
      %v1834 = vpop.f32.mrf.mxu0
      %v1835 = vadd.f32 %v1482, %v1834
      %1836 = vmatmul.f32.gmra.mxu0 %v302
      %v1837 = vpop.f32.mrf.mxu0
      %v1838 = vadd.f32 %v1485, %v1837
      %1839 = vmatmul.f32.gmra.mxu0 %v306
      %v1840 = vpop.f32.mrf.mxu0
      %v1841 = vadd.f32 %v1488, %v1840
      %1842 = vmatmul.f32.gmra.mxu0 %v310
      %v1843 = vpop.f32.mrf.mxu0
      %v1844 = vadd.f32 %v1491, %v1843
      %1845 = vmatmul.f32.gmra.mxu0 %v314
      %v1846 = vpop.f32.mrf.mxu0
      %v1847 = vadd.f32 %v1494, %v1846
      %1848 = vmatmul.f32.gmra.mxu0 %v318
      %v1849 = vpop.f32.mrf.mxu0
      %v1850 = vadd.f32 %v1497, %v1849
      %1851 = vmatmul.f32.gmra.mxu0 %v322
      %v1852 = vpop.f32.mrf.mxu0
      %v1853 = vadd.f32 %v1500, %v1852
      %1854 = vmatmul.f32.gmra.mxu0 %v326
      %v1855 = vpop.f32.mrf.mxu0
      %v1856 = vadd.f32 %v1503, %v1855
      %1857 = vmatmul.f32.gmra.mxu0 %v330
      %v1858 = vpop.f32.mrf.mxu0
      %v1859 = vadd.f32 %v1506, %v1858
      %1860 = vmatmul.f32.gmra.mxu0 %v334
      %v1861 = vpop.f32.mrf.mxu0
      %v1862 = vadd.f32 %v1509, %v1861
      %1863 = vmatmul.f32.gmra.mxu0 %v338
      %v1864 = vpop.f32.mrf.mxu0
      %v1865 = vadd.f32 %v1512, %v1864
      %1866 = vmatmul.f32.gmra.mxu0 %v342
      %v1867 = vpop.f32.mrf.mxu0
      %v1868 = vadd.f32 %v1515, %v1867
      %1869 = vmatmul.f32.gmra.mxu0 %v346
      %v1870 = vpop.f32.mrf.mxu0
      %v1871 = vadd.f32 %v1518, %v1870
      %1872 = vmatmul.f32.gmra.mxu0 %v350
      %v1873 = vpop.f32.mrf.mxu0
      %v1874 = vadd.f32 %v1521, %v1873
      %1875 = vmatmul.f32.gmra.mxu0 %v354
      %v1876 = vpop.f32.mrf.mxu0
      %v1877 = vadd.f32 %v1524, %v1876
      %1878 = vmatmul.f32.gmra.mxu0 %v358
      %v1879 = vpop.f32.mrf.mxu0
      %v1880 = vadd.f32 %v1527, %v1879
      %1881 = vmatmul.f32.gmra.mxu0 %v362
      %v1882 = vpop.f32.mrf.mxu0
      %v1883 = vadd.f32 %v1530, %v1882
      %1884 = vmatmul.f32.gmra.mxu0 %v366
      %v1885 = vpop.f32.mrf.mxu0
      %v1886 = vadd.f32 %v1533, %v1885
      %1887 = vmatmul.f32.gmra.mxu0 %v370
      %v1888 = vpop.f32.mrf.mxu0
      %v1889 = vadd.f32 %v1536, %v1888
      %1890 = vmatmul.f32.gmra.mxu0 %v374
      %v1891 = vpop.f32.mrf.mxu0
      %v1892 = vadd.f32 %v1539, %v1891
      %1893 = vmatmul.f32.gmra.mxu0 %v378
      %v1894 = vpop.f32.mrf.mxu0
      %v1895 = vadd.f32 %v1542, %v1894
      %1896 = vmatmul.f32.gmra.mxu0 %v382
      %v1897 = vpop.f32.mrf.mxu0
      %v1898 = vadd.f32 %v1545, %v1897
      %1899 = vmatmul.f32.gmra.mxu0 %v386
      %v1900 = vpop.f32.mrf.mxu0
      %v1901 = vadd.f32 %v1548, %v1900
      %1902 = vmatmul.f32.gmra.mxu0 %v390
      %v1903 = vpop.f32.mrf.mxu0
      %v1904 = vadd.f32 %v1551, %v1903
      %1905 = vmatmul.f32.gmra.mxu0 %v394
      %v1906 = vpop.f32.mrf.mxu0
      %v1907 = vadd.f32 %v1554, %v1906
      %1908 = vmatmul.f32.gmra.mxu0 %v398
      %v1909 = vpop.f32.mrf.mxu0
      %v1910 = vadd.f32 %v1557, %v1909
      %1911 = vmatmul.f32.gmra.mxu0 %v402
      %v1912 = vpop.f32.mrf.mxu0
      %v1913 = vadd.f32 %v1560, %v1912
      %1914 = vmatmul.f32.gmra.mxu0 %v406
      %v1915 = vpop.f32.mrf.mxu0
      %v1916 = vadd.f32 %v1563, %v1915
      %1917 = vmatmul.f32.gmra.mxu0 %v410
      %v1918 = vpop.f32.mrf.mxu0
      %v1919 = vadd.f32 %v1566, %v1918
      %1920 = vmatmul.f32.gmra.mxu0 %v414
      %v1921 = vpop.f32.mrf.mxu0
      %v1922 = vadd.f32 %v1569, %v1921
      %1923 = vmatmul.f32.gmra.mxu0 %v418
      %v1924 = vpop.f32.mrf.mxu0
      %v1925 = vadd.f32 %v1572, %v1924
      %1926 = vmatmul.f32.gmra.mxu0 %v422
      %v1927 = vpop.f32.mrf.mxu0
      %v1928 = vadd.f32 %v1575, %v1927
      %1929 = vmatmul.f32.gmra.mxu0 %v426
      %v1930 = vpop.f32.mrf.mxu0
      %v1931 = vadd.f32 %v1578, %v1930
      %1932 = vmatmul.f32.gmra.mxu0 %v430
      %v1933 = vpop.f32.mrf.mxu0
      %v1934 = vadd.f32 %v1581, %v1933
      %1935 = vmatmul.f32.gmra.mxu0 %v434
      %v1936 = vpop.f32.mrf.mxu0
      %v1937 = vadd.f32 %v1584, %v1936
      %1938 = vmatmul.f32.gmra.mxu0 %v438
      %v1939 = vpop.f32.mrf.mxu0
      %v1940 = vadd.f32 %v1587, %v1939
      %1941 = vmatmul.f32.gmra.mxu0 %v442
      %v1942 = vpop.f32.mrf.mxu0
      %v1943 = vadd.f32 %v1590, %v1942
      %1944 = vmatmul.f32.gmra.mxu0 %v446
      %v1945 = vpop.f32.mrf.mxu0
      %v1946 = vadd.f32 %v1593, %v1945
      %1947 = vmatmul.f32.gmra.mxu0 %v450
      %v1948 = vpop.f32.mrf.mxu0
      %v1949 = vadd.f32 %v1596, %v1948
      %1950 = vmatmul.f32.gmra.mxu0 %v454
      %v1951 = vpop.f32.mrf.mxu0
      %v1952 = vadd.f32 %v1599, %v1951
      %1953 = vmatmul.f32.gmra.mxu0 %v458
      %v1954 = vpop.f32.mrf.mxu0
      %v1955 = vadd.f32 %v1602, %v1954
      %1956 = vmatmul.f32.gmra.mxu0 %v462
      %v1957 = vpop.f32.mrf.mxu0
      %v1958 = vadd.f32 %v1605, %v1957
      %1959 = vmatmul.f32.gmra.mxu0 %v466
      %v1960 = vpop.f32.mrf.mxu0
      %v1961 = vadd.f32 %v1608, %v1960
      %1962 = vmatmul.f32.gmra.mxu0 %v470
      %v1963 = vpop.f32.mrf.mxu0
      %v1964 = vadd.f32 %v1611, %v1963
      %1965 = vmatmul.f32.gmra.mxu0 %v474
      %v1966 = vpop.f32.mrf.mxu0
      %v1967 = vadd.f32 %v1614, %v1966
      %1968 = vmatmul.f32.gmra.mxu0 %v478
      %v1969 = vpop.f32.mrf.mxu0
      %v1970 = vadd.f32 %v1617, %v1969
      %1971 = vmatmul.f32.gmra.mxu0 %v482
      %v1972 = vpop.f32.mrf.mxu0
      %v1973 = vadd.f32 %v1620, %v1972
      %1974 = vmatmul.f32.gmra.mxu0 %v486
      %v1975 = vpop.f32.mrf.mxu0
      %v1976 = vadd.f32 %v1623, %v1975
      %1977 = vmatmul.f32.gmra.mxu0 %v490
      %v1978 = vpop.f32.mrf.mxu0
      %v1979 = vadd.f32 %v1626, %v1978
      %1980 = vmatmul.f32.gmra.mxu0 %v494
      %v1981 = vpop.f32.mrf.mxu0
      %v1982 = vadd.f32 %v1629, %v1981
      %1983 = vmatmul.f32.gmra.mxu0 %v498
      %v1984 = vpop.f32.mrf.mxu0
      %v1985 = vadd.f32 %v1632, %v1984
      %1986 = vmatmul.f32.gmra.mxu0 %v502
      %v1987 = vpop.f32.mrf.mxu0
      %v1988 = vadd.f32 %v1635, %v1987
      %1989 = vmatmul.f32.gmra.mxu0 %v506
      %v1990 = vpop.f32.mrf.mxu0
      %v1991 = vadd.f32 %v1638, %v1990
      %1992 = vmatmul.f32.gmra.mxu0 %v510
      %v1993 = vpop.f32.mrf.mxu0
      %v1994 = vadd.f32 %v1641, %v1993
      %1995 = vmatmul.f32.gmra.mxu0 %v514
      %v1996 = vpop.f32.mrf.mxu0
      %v1997 = vadd.f32 %v1644, %v1996
      %1998 = vmatmul.f32.gmra.mxu0 %v518
      %v1999 = vpop.f32.mrf.mxu0
      %v2000 = vadd.f32 %v1647, %v1999
      %2001 = vmatmul.f32.gmra.mxu0 %v522
      %v2002 = vpop.f32.mrf.mxu0
      %v2003 = vadd.f32 %v1650, %v2002
      %2004 = vmatmul.f32.gmra.mxu0 %v526
      %v2005 = vpop.f32.mrf.mxu0
      %v2006 = vadd.f32 %v1653, %v2005
      %2007 = vmatmul.f32.gmra.mxu0 %v530
      %v2008 = vpop.f32.mrf.mxu0
      %v2009 = vadd.f32 %v1656, %v2008
      %2010 = vmatmul.f32.gmra.mxu0 %v534
      %v2011 = vpop.f32.mrf.mxu0
      %v2012 = vadd.f32 %v1659, %v2011
      %2013 = vmatmul.f32.gmra.mxu0 %v538
      %v2014 = vpop.f32.mrf.mxu0
      %v2015 = vadd.f32 %v1662, %v2014
      %2016 = vmatmul.f32.gmra.mxu0 %v542
      %v2017 = vpop.f32.mrf.mxu0
      %v2018 = vadd.f32 %v1665, %v2017
      %2019 = vmatmul.f32.gmra.mxu0 %v546
      %v2020 = vpop.f32.mrf.mxu0
      %v2021 = vadd.f32 %v1668, %v2020
      %2022 = vmatmul.f32.gmra.mxu0 %v550
      %v2023 = vpop.f32.mrf.mxu0
      %v2024 = vadd.f32 %v1671, %v2023
      %2025 = vmatmul.f32.gmra.mxu0 %v554
      %v2026 = vpop.f32.mrf.mxu0
      %v2027 = vadd.f32 %v1674, %v2026
      %2028 = vmatmul.f32.gmra.mxu0 %v558
      %v2029 = vpop.f32.mrf.mxu0
      %v2030 = vadd.f32 %v1677, %v2029
      %2031 = vmatmul.f32.gmra.mxu0 %v562
      %v2032 = vpop.f32.mrf.mxu0
      %v2033 = vadd.f32 %v1680, %v2032
      %2034 = vmatmul.f32.gmra.mxu0 %v566
      %v2035 = vpop.f32.mrf.mxu0
      %v2036 = vadd.f32 %v1683, %v2035
      %2037 = vmatmul.f32.gmra.mxu0 %v570
      %v2038 = vpop.f32.mrf.mxu0
      %v2039 = vadd.f32 %v1686, %v2038
      %2040 = vmatmul.f32.gmra.mxu0 %v574
      %v2041 = vpop.f32.mrf.mxu0
      %v2042 = vadd.f32 %v1689, %v2041
      %2043 = vmatmul.f32.gmra.mxu0 %v578
      %v2044 = vpop.f32.mrf.mxu0
      %v2045 = vadd.f32 %v1692, %v2044
      %2046 = vmatmul.f32.gmra.mxu0 %v582
      %v2047 = vpop.f32.mrf.mxu0
      %v2048 = vadd.f32 %v1695, %v2047
      %2049 = vmatmul.f32.gmra.mxu0 %v586
      %v2050 = vpop.f32.mrf.mxu0
      %v2051 = vadd.f32 %v1698, %v2050
      %2052 = vmatmul.f32.gmra.mxu0 %v590
      %v2053 = vpop.f32.mrf.mxu0
      %v2054 = vadd.f32 %v1701, %v2053
      %2055 = vmatmul.f32.gmra.mxu0 %v594
      %v2056 = vpop.f32.mrf.mxu0
      %v2057 = vadd.f32 %v1704, %v2056
      %2058 = vmatmul.f32.gmra.mxu0 %v598
      %v2059 = vpop.f32.mrf.mxu0
      %v2060 = vadd.f32 %v1707, %v2059
      %2061 = vmatmul.f32.gmra.mxu0 %v602
      %v2062 = vpop.f32.mrf.mxu0
      %v2063 = vadd.f32 %v1710, %v2062
      %2064 = vmatmul.f32.gmra.mxu0 %v606
      %v2065 = vpop.f32.mrf.mxu0
      %v2066 = vadd.f32 %v1713, %v2065
      %2067 = vmatmul.f32.gmra.mxu0 %v610
      %v2068 = vpop.f32.mrf.mxu0
      %v2069 = vadd.f32 %v1716, %v2068
      %2070 = vmatmul.f32.gmra.mxu0 %v614
      %v2071 = vpop.f32.mrf.mxu0
      %v2072 = vadd.f32 %v1719, %v2071
      %2073 = vmatmul.f32.gmra.mxu0 %v618
      %v2074 = vpop.f32.mrf.mxu0
      %v2075 = vadd.f32 %v1722, %v2074
      %2076 = vmatmul.f32.gmra.mxu0 %v622
      %v2077 = vpop.f32.mrf.mxu0
      %v2078 = vadd.f32 %v1725, %v2077
      %2079 = vmatmul.f32.gmra.mxu0 %v626
      %v2080 = vpop.f32.mrf.mxu0
      %v2081 = vadd.f32 %v1728, %v2080
      %2082 = vmatmul.f32.gmra.mxu0 %v630
      %v2083 = vpop.f32.mrf.mxu0
      %v2084 = vadd.f32 %v1731, %v2083
      %2085 = vmatmul.f32.gmra.mxu0 %v634
      %v2086 = vpop.f32.mrf.mxu0
      %v2087 = vadd.f32 %v1734, %v2086
      %2088 = vmatmul.f32.gmra.mxu0 %v638
      %v2089 = vpop.f32.mrf.mxu0
      %v2090 = vadd.f32 %v1737, %v2089
      %2091 = vdwg.mxu0
      %2092 = vmatpush.msra.mxu0 0.0
      %2093 = vmatpush.msra.mxu0 0.0
      %2094 = vmatpush.msra.mxu0 0.0
      %2095 = vmatpush.msra.mxu0 0.0
      %2096 = vmatpush.msra.mxu0 0.0
      %2097 = vmatpush.msra.mxu0 0.0
      %2098 = vmatpush.msra.mxu0 0.0
      %2099 = vmatpush.msra.mxu0 0.0
      %2100 = vmatpush.msra.mxu0 %v695
      %2101 = vmatpush.msra.mxu0 %v694
      %2102 = vmatpush.msra.mxu0 %v693
      %2103 = vmatpush.msra.mxu0 %v692
      %2104 = vmatpush.msra.mxu0 %v691
      %2105 = vmatpush.msra.mxu0 %v690
      %2106 = vmatpush.msra.mxu0 %v689
      %2107 = vmatpush.msra.mxu0 %v688
      %2108 = vmatmul.f32.gmra.mxu0 %v698
      %v2109 = vpop.f32.mrf.mxu0
      %v2110 = vadd.f32 %v1757, %v2109
      %2111 = vmatmul.f32.gmra.mxu0 %v701
      %v2112 = vpop.f32.mrf.mxu0
      %v2113 = vadd.f32 %v1760, %v2112
      %2114 = vmatmul.f32.gmra.mxu0 %v704
      %v2115 = vpop.f32.mrf.mxu0
      %v2116 = vadd.f32 %v1763, %v2115
      %2117 = vmatmul.f32.gmra.mxu0 %v707
      %v2118 = vpop.f32.mrf.mxu0
      %v2119 = vadd.f32 %v1766, %v2118
      %2120 = vmatmul.f32.gmra.mxu0 %v710
      %v2121 = vpop.f32.mrf.mxu0
      %v2122 = vadd.f32 %v1769, %v2121
      %2123 = vmatmul.f32.gmra.mxu0 %v713
      %v2124 = vpop.f32.mrf.mxu0
      %v2125 = vadd.f32 %v1772, %v2124
      %2126 = vmatmul.f32.gmra.mxu0 %v716
      %v2127 = vpop.f32.mrf.mxu0
      %v2128 = vadd.f32 %v1775, %v2127
      %2129 = vmatmul.f32.gmra.mxu0 %v719
      %v2130 = vpop.f32.mrf.mxu0
      %v2131 = vadd.f32 %v1778, %v2130
      %2132 = vmatmul.f32.gmra.mxu0 %v722
      %v2133 = vpop.f32.mrf.mxu0
      %v2134 = vadd.f32 %v1781, %v2133
      %2135 = vmatmul.f32.gmra.mxu0 %v725
      %v2136 = vpop.f32.mrf.mxu0
      %v2137 = vadd.f32 %v1784, %v2136
      %2138 = vmatmul.f32.gmra.mxu0 %v728
      %v2139 = vpop.f32.mrf.mxu0
      %v2140 = vadd.f32 %v1787, %v2139
      %2141 = vmatmul.f32.gmra.mxu0 %v731
      %v2142 = vpop.f32.mrf.mxu0
      %v2143 = vadd.f32 %v1790, %v2142
      %2144 = vmatmul.f32.gmra.mxu0 %v734
      %v2145 = vpop.f32.mrf.mxu0
      %v2146 = vadd.f32 %v1793, %v2145
      %2147 = vmatmul.f32.gmra.mxu0 %v737
      %v2148 = vpop.f32.mrf.mxu0
      %v2149 = vadd.f32 %v1796, %v2148
      %2150 = vmatmul.f32.gmra.mxu0 %v740
      %v2151 = vpop.f32.mrf.mxu0
      %v2152 = vadd.f32 %v1799, %v2151
      %2153 = vmatmul.f32.gmra.mxu0 %v743
      %v2154 = vpop.f32.mrf.mxu0
      %v2155 = vadd.f32 %v1802, %v2154
      %2156 = vmatmul.f32.gmra.mxu0 %v746
      %v2157 = vpop.f32.mrf.mxu0
      %v2158 = vadd.f32 %v1805, %v2157
      %2159 = vmatmul.f32.gmra.mxu0 %v749
      %v2160 = vpop.f32.mrf.mxu0
      %v2161 = vadd.f32 %v1808, %v2160
      %2162 = vmatmul.f32.gmra.mxu0 %v752
      %v2163 = vpop.f32.mrf.mxu0
      %v2164 = vadd.f32 %v1811, %v2163
      %2165 = vmatmul.f32.gmra.mxu0 %v755
      %v2166 = vpop.f32.mrf.mxu0
      %v2167 = vadd.f32 %v1814, %v2166
      %2168 = vmatmul.f32.gmra.mxu0 %v758
      %v2169 = vpop.f32.mrf.mxu0
      %v2170 = vadd.f32 %v1817, %v2169
      %2171 = vmatmul.f32.gmra.mxu0 %v761
      %v2172 = vpop.f32.mrf.mxu0
      %v2173 = vadd.f32 %v1820, %v2172
      %2174 = vmatmul.f32.gmra.mxu0 %v764
      %v2175 = vpop.f32.mrf.mxu0
      %v2176 = vadd.f32 %v1823, %v2175
      %2177 = vmatmul.f32.gmra.mxu0 %v767
      %v2178 = vpop.f32.mrf.mxu0
      %v2179 = vadd.f32 %v1826, %v2178
      %2180 = vmatmul.f32.gmra.mxu0 %v770
      %v2181 = vpop.f32.mrf.mxu0
      %v2182 = vadd.f32 %v1829, %v2181
      %2183 = vmatmul.f32.gmra.mxu0 %v773
      %v2184 = vpop.f32.mrf.mxu0
      %v2185 = vadd.f32 %v1832, %v2184
      %2186 = vmatmul.f32.gmra.mxu0 %v776
      %v2187 = vpop.f32.mrf.mxu0
      %v2188 = vadd.f32 %v1835, %v2187
      %2189 = vmatmul.f32.gmra.mxu0 %v779
      %v2190 = vpop.f32.mrf.mxu0
      %v2191 = vadd.f32 %v1838, %v2190
      %2192 = vmatmul.f32.gmra.mxu0 %v782
      %v2193 = vpop.f32.mrf.mxu0
      %v2194 = vadd.f32 %v1841, %v2193
      %2195 = vmatmul.f32.gmra.mxu0 %v785
      %v2196 = vpop.f32.mrf.mxu0
      %v2197 = vadd.f32 %v1844, %v2196
      %2198 = vmatmul.f32.gmra.mxu0 %v788
      %v2199 = vpop.f32.mrf.mxu0
      %v2200 = vadd.f32 %v1847, %v2199
      %2201 = vmatmul.f32.gmra.mxu0 %v791
      %v2202 = vpop.f32.mrf.mxu0
      %v2203 = vadd.f32 %v1850, %v2202
      %2204 = vmatmul.f32.gmra.mxu0 %v794
      %v2205 = vpop.f32.mrf.mxu0
      %v2206 = vadd.f32 %v1853, %v2205
      %2207 = vmatmul.f32.gmra.mxu0 %v797
      %v2208 = vpop.f32.mrf.mxu0
      %v2209 = vadd.f32 %v1856, %v2208
      %2210 = vmatmul.f32.gmra.mxu0 %v800
      %v2211 = vpop.f32.mrf.mxu0
      %v2212 = vadd.f32 %v1859, %v2211
      %2213 = vmatmul.f32.gmra.mxu0 %v803
      %v2214 = vpop.f32.mrf.mxu0
      %v2215 = vadd.f32 %v1862, %v2214
      %2216 = vmatmul.f32.gmra.mxu0 %v806
      %v2217 = vpop.f32.mrf.mxu0
      %v2218 = vadd.f32 %v1865, %v2217
      %2219 = vmatmul.f32.gmra.mxu0 %v809
      %v2220 = vpop.f32.mrf.mxu0
      %v2221 = vadd.f32 %v1868, %v2220
      %2222 = vmatmul.f32.gmra.mxu0 %v812
      %v2223 = vpop.f32.mrf.mxu0
      %v2224 = vadd.f32 %v1871, %v2223
      %2225 = vmatmul.f32.gmra.mxu0 %v815
      %v2226 = vpop.f32.mrf.mxu0
      %v2227 = vadd.f32 %v1874, %v2226
      %2228 = vmatmul.f32.gmra.mxu0 %v818
      %v2229 = vpop.f32.mrf.mxu0
      %v2230 = vadd.f32 %v1877, %v2229
      %2231 = vmatmul.f32.gmra.mxu0 %v821
      %v2232 = vpop.f32.mrf.mxu0
      %v2233 = vadd.f32 %v1880, %v2232
      %2234 = vmatmul.f32.gmra.mxu0 %v824
      %v2235 = vpop.f32.mrf.mxu0
      %v2236 = vadd.f32 %v1883, %v2235
      %2237 = vmatmul.f32.gmra.mxu0 %v827
      %v2238 = vpop.f32.mrf.mxu0
      %v2239 = vadd.f32 %v1886, %v2238
      %2240 = vmatmul.f32.gmra.mxu0 %v830
      %v2241 = vpop.f32.mrf.mxu0
      %v2242 = vadd.f32 %v1889, %v2241
      %2243 = vmatmul.f32.gmra.mxu0 %v833
      %v2244 = vpop.f32.mrf.mxu0
      %v2245 = vadd.f32 %v1892, %v2244
      %2246 = vmatmul.f32.gmra.mxu0 %v836
      %v2247 = vpop.f32.mrf.mxu0
      %v2248 = vadd.f32 %v1895, %v2247
      %2249 = vmatmul.f32.gmra.mxu0 %v839
      %v2250 = vpop.f32.mrf.mxu0
      %v2251 = vadd.f32 %v1898, %v2250
      %2252 = vmatmul.f32.gmra.mxu0 %v842
      %v2253 = vpop.f32.mrf.mxu0
      %v2254 = vadd.f32 %v1901, %v2253
      %2255 = vmatmul.f32.gmra.mxu0 %v845
      %v2256 = vpop.f32.mrf.mxu0
      %v2257 = vadd.f32 %v1904, %v2256
      %2258 = vmatmul.f32.gmra.mxu0 %v848
      %v2259 = vpop.f32.mrf.mxu0
      %v2260 = vadd.f32 %v1907, %v2259
      %2261 = vmatmul.f32.gmra.mxu0 %v851
      %v2262 = vpop.f32.mrf.mxu0
      %v2263 = vadd.f32 %v1910, %v2262
      %2264 = vmatmul.f32.gmra.mxu0 %v854
      %v2265 = vpop.f32.mrf.mxu0
      %v2266 = vadd.f32 %v1913, %v2265
      %2267 = vmatmul.f32.gmra.mxu0 %v857
      %v2268 = vpop.f32.mrf.mxu0
      %v2269 = vadd.f32 %v1916, %v2268
      %2270 = vmatmul.f32.gmra.mxu0 %v860
      %v2271 = vpop.f32.mrf.mxu0
      %v2272 = vadd.f32 %v1919, %v2271
      %2273 = vmatmul.f32.gmra.mxu0 %v863
      %v2274 = vpop.f32.mrf.mxu0
      %v2275 = vadd.f32 %v1922, %v2274
      %2276 = vmatmul.f32.gmra.mxu0 %v866
      %v2277 = vpop.f32.mrf.mxu0
      %v2278 = vadd.f32 %v1925, %v2277
      %2279 = vmatmul.f32.gmra.mxu0 %v869
      %v2280 = vpop.f32.mrf.mxu0
      %v2281 = vadd.f32 %v1928, %v2280
      %2282 = vmatmul.f32.gmra.mxu0 %v872
      %v2283 = vpop.f32.mrf.mxu0
      %v2284 = vadd.f32 %v1931, %v2283
      %2285 = vmatmul.f32.gmra.mxu0 %v875
      %v2286 = vpop.f32.mrf.mxu0
      %v2287 = vadd.f32 %v1934, %v2286
      %2288 = vmatmul.f32.gmra.mxu0 %v878
      %v2289 = vpop.f32.mrf.mxu0
      %v2290 = vadd.f32 %v1937, %v2289
      %2291 = vmatmul.f32.gmra.mxu0 %v881
      %v2292 = vpop.f32.mrf.mxu0
      %v2293 = vadd.f32 %v1940, %v2292
      %2294 = vmatmul.f32.gmra.mxu0 %v884
      %v2295 = vpop.f32.mrf.mxu0
      %v2296 = vadd.f32 %v1943, %v2295
      %2297 = vmatmul.f32.gmra.mxu0 %v887
      %v2298 = vpop.f32.mrf.mxu0
      %v2299 = vadd.f32 %v1946, %v2298
      %2300 = vmatmul.f32.gmra.mxu0 %v890
      %v2301 = vpop.f32.mrf.mxu0
      %v2302 = vadd.f32 %v1949, %v2301
      %2303 = vmatmul.f32.gmra.mxu0 %v893
      %v2304 = vpop.f32.mrf.mxu0
      %v2305 = vadd.f32 %v1952, %v2304
      %2306 = vmatmul.f32.gmra.mxu0 %v896
      %v2307 = vpop.f32.mrf.mxu0
      %v2308 = vadd.f32 %v1955, %v2307
      %2309 = vmatmul.f32.gmra.mxu0 %v899
      %v2310 = vpop.f32.mrf.mxu0
      %v2311 = vadd.f32 %v1958, %v2310
      %2312 = vmatmul.f32.gmra.mxu0 %v902
      %v2313 = vpop.f32.mrf.mxu0
      %v2314 = vadd.f32 %v1961, %v2313
      %2315 = vmatmul.f32.gmra.mxu0 %v905
      %v2316 = vpop.f32.mrf.mxu0
      %v2317 = vadd.f32 %v1964, %v2316
      %2318 = vmatmul.f32.gmra.mxu0 %v908
      %v2319 = vpop.f32.mrf.mxu0
      %v2320 = vadd.f32 %v1967, %v2319
      %2321 = vmatmul.f32.gmra.mxu0 %v911
      %v2322 = vpop.f32.mrf.mxu0
      %v2323 = vadd.f32 %v1970, %v2322
      %2324 = vmatmul.f32.gmra.mxu0 %v914
      %v2325 = vpop.f32.mrf.mxu0
      %v2326 = vadd.f32 %v1973, %v2325
      %2327 = vmatmul.f32.gmra.mxu0 %v917
      %v2328 = vpop.f32.mrf.mxu0
      %v2329 = vadd.f32 %v1976, %v2328
      %2330 = vmatmul.f32.gmra.mxu0 %v920
      %v2331 = vpop.f32.mrf.mxu0
      %v2332 = vadd.f32 %v1979, %v2331
      %2333 = vmatmul.f32.gmra.mxu0 %v923
      %v2334 = vpop.f32.mrf.mxu0
      %v2335 = vadd.f32 %v1982, %v2334
      %2336 = vmatmul.f32.gmra.mxu0 %v926
      %v2337 = vpop.f32.mrf.mxu0
      %v2338 = vadd.f32 %v1985, %v2337
      %2339 = vmatmul.f32.gmra.mxu0 %v929
      %v2340 = vpop.f32.mrf.mxu0
      %v2341 = vadd.f32 %v1988, %v2340
      %2342 = vmatmul.f32.gmra.mxu0 %v932
      %v2343 = vpop.f32.mrf.mxu0
      %v2344 = vadd.f32 %v1991, %v2343
      %2345 = vmatmul.f32.gmra.mxu0 %v935
      %v2346 = vpop.f32.mrf.mxu0
      %v2347 = vadd.f32 %v1994, %v2346
      %2348 = vmatmul.f32.gmra.mxu0 %v938
      %v2349 = vpop.f32.mrf.mxu0
      %v2350 = vadd.f32 %v1997, %v2349
      %2351 = vmatmul.f32.gmra.mxu0 %v941
      %v2352 = vpop.f32.mrf.mxu0
      %v2353 = vadd.f32 %v2000, %v2352
      %2354 = vmatmul.f32.gmra.mxu0 %v944
      %v2355 = vpop.f32.mrf.mxu0
      %v2356 = vadd.f32 %v2003, %v2355
      %2357 = vmatmul.f32.gmra.mxu0 %v947
      %v2358 = vpop.f32.mrf.mxu0
      %v2359 = vadd.f32 %v2006, %v2358
      %2360 = vmatmul.f32.gmra.mxu0 %v950
      %v2361 = vpop.f32.mrf.mxu0
      %v2362 = vadd.f32 %v2009, %v2361
      %2363 = vmatmul.f32.gmra.mxu0 %v953
      %v2364 = vpop.f32.mrf.mxu0
      %v2365 = vadd.f32 %v2012, %v2364
      %2366 = vmatmul.f32.gmra.mxu0 %v956
      %v2367 = vpop.f32.mrf.mxu0
      %v2368 = vadd.f32 %v2015, %v2367
      %2369 = vmatmul.f32.gmra.mxu0 %v959
      %v2370 = vpop.f32.mrf.mxu0
      %v2371 = vadd.f32 %v2018, %v2370
      %2372 = vmatmul.f32.gmra.mxu0 %v962
      %v2373 = vpop.f32.mrf.mxu0
      %v2374 = vadd.f32 %v2021, %v2373
      %2375 = vmatmul.f32.gmra.mxu0 %v965
      %v2376 = vpop.f32.mrf.mxu0
      %v2377 = vadd.f32 %v2024, %v2376
      %2378 = vmatmul.f32.gmra.mxu0 %v968
      %v2379 = vpop.f32.mrf.mxu0
      %v2380 = vadd.f32 %v2027, %v2379
      %2381 = vmatmul.f32.gmra.mxu0 %v971
      %v2382 = vpop.f32.mrf.mxu0
      %v2383 = vadd.f32 %v2030, %v2382
      %2384 = vmatmul.f32.gmra.mxu0 %v974
      %v2385 = vpop.f32.mrf.mxu0
      %v2386 = vadd.f32 %v2033, %v2385
      %2387 = vmatmul.f32.gmra.mxu0 %v977
      %v2388 = vpop.f32.mrf.mxu0
      %v2389 = vadd.f32 %v2036, %v2388
      %2390 = vmatmul.f32.gmra.mxu0 %v980
      %v2391 = vpop.f32.mrf.mxu0
      %v2392 = vadd.f32 %v2039, %v2391
      %2393 = vmatmul.f32.gmra.mxu0 %v983
      %v2394 = vpop.f32.mrf.mxu0
      %v2395 = vadd.f32 %v2042, %v2394
      %2396 = vmatmul.f32.gmra.mxu0 %v986
      %v2397 = vpop.f32.mrf.mxu0
      %v2398 = vadd.f32 %v2045, %v2397
      %2399 = vmatmul.f32.gmra.mxu0 %v989
      %v2400 = vpop.f32.mrf.mxu0
      %v2401 = vadd.f32 %v2048, %v2400
      %2402 = vmatmul.f32.gmra.mxu0 %v992
      %v2403 = vpop.f32.mrf.mxu0
      %v2404 = vadd.f32 %v2051, %v2403
      %2405 = vmatmul.f32.gmra.mxu0 %v995
      %v2406 = vpop.f32.mrf.mxu0
      %v2407 = vadd.f32 %v2054, %v2406
      %2408 = vmatmul.f32.gmra.mxu0 %v998
      %v2409 = vpop.f32.mrf.mxu0
      %v2410 = vadd.f32 %v2057, %v2409
      %2411 = vmatmul.f32.gmra.mxu0 %v1001
      %v2412 = vpop.f32.mrf.mxu0
      %v2413 = vadd.f32 %v2060, %v2412
      %2414 = vmatmul.f32.gmra.mxu0 %v1004
      %v2415 = vpop.f32.mrf.mxu0
      %v2416 = vadd.f32 %v2063, %v2415
      %2417 = vmatmul.f32.gmra.mxu0 %v1007
      %v2418 = vpop.f32.mrf.mxu0
      %v2419 = vadd.f32 %v2066, %v2418
      %2420 = vmatmul.f32.gmra.mxu0 %v1010
      %v2421 = vpop.f32.mrf.mxu0
      %v2422 = vadd.f32 %v2069, %v2421
      %2423 = vmatmul.f32.gmra.mxu0 %v1013
      %v2424 = vpop.f32.mrf.mxu0
      %v2425 = vadd.f32 %v2072, %v2424
      %2426 = vmatmul.f32.gmra.mxu0 %v1016
      %v2427 = vpop.f32.mrf.mxu0
      %v2428 = vadd.f32 %v2075, %v2427
      %2429 = vmatmul.f32.gmra.mxu0 %v1019
      %v2430 = vpop.f32.mrf.mxu0
      %v2431 = vadd.f32 %v2078, %v2430
      %2432 = vmatmul.f32.gmra.mxu0 %v1022
      %v2433 = vpop.f32.mrf.mxu0
      %v2434 = vadd.f32 %v2081, %v2433
      %2435 = vmatmul.f32.gmra.mxu0 %v1025
      %v2436 = vpop.f32.mrf.mxu0
      %v2437 = vadd.f32 %v2084, %v2436
      %2438 = vmatmul.f32.gmra.mxu0 %v1028
      %v2439 = vpop.f32.mrf.mxu0
      %v2440 = vadd.f32 %v2087, %v2439
      %2441 = vmatmul.f32.gmra.mxu0 %v1031
      %v2442 = vpop.f32.mrf.mxu0
      %v2443 = vadd.f32 %v2090, %v2442
      %2444 = vdwg.mxu0
      %vm2445 = vcmask 400384
      %2446 = vst.msk [vmem:[%s190] sm:$0xff] %vm2445, %v2110
      %2447 = vst.msk [vmem:[%s190 + $0x8] sm:$0xff] %vm2445, %v2113
      %2448 = vst.msk [vmem:[%s190 + $0x10] sm:$0xff] %vm2445, %v2116
      %2449 = vst.msk [vmem:[%s190 + $0x18] sm:$0xff] %vm2445, %v2119
      %2450 = vst.msk [vmem:[%s190 + $0x20] sm:$0xff] %vm2445, %v2122
      %2451 = vst.msk [vmem:[%s190 + $0x28] sm:$0xff] %vm2445, %v2125
      %2452 = vst.msk [vmem:[%s190 + $0x30] sm:$0xff] %vm2445, %v2128
      %2453 = vst.msk [vmem:[%s190 + $0x38] sm:$0xff] %vm2445, %v2131
      %2454 = vst.msk [vmem:[%s190 + $0x40] sm:$0xff] %vm2445, %v2134
      %2455 = vst.msk [vmem:[%s190 + $0x48] sm:$0xff] %vm2445, %v2137
      %2456 = vst.msk [vmem:[%s190 + $0x50] sm:$0xff] %vm2445, %v2140
      %2457 = vst.msk [vmem:[%s190 + $0x58] sm:$0xff] %vm2445, %v2143
      %2458 = vst.msk [vmem:[%s190 + $0x60] sm:$0xff] %vm2445, %v2146
      %2459 = vst.msk [vmem:[%s190 + $0x68] sm:$0xff] %vm2445, %v2149
      %2460 = vst.msk [vmem:[%s190 + $0x70] sm:$0xff] %vm2445, %v2152
      %2461 = vst.msk [vmem:[%s190 + $0x78] sm:$0xff] %vm2445, %v2155
      %2462 = vst.msk [vmem:[%s190 + $0x80] sm:$0xff] %vm2445, %v2158
      %2463 = vst.msk [vmem:[%s190 + $0x88] sm:$0xff] %vm2445, %v2161
      %2464 = vst.msk [vmem:[%s190 + $0x90] sm:$0xff] %vm2445, %v2164
      %2465 = vst.msk [vmem:[%s190 + $0x98] sm:$0xff] %vm2445, %v2167
      %2466 = vst.msk [vmem:[%s190 + $0xa0] sm:$0xff] %vm2445, %v2170
      %2467 = vst.msk [vmem:[%s190 + $0xa8] sm:$0xff] %vm2445, %v2173
      %2468 = vst.msk [vmem:[%s190 + $0xb0] sm:$0xff] %vm2445, %v2176
      %2469 = vst.msk [vmem:[%s190 + $0xb8] sm:$0xff] %vm2445, %v2179
      %2470 = vst.msk [vmem:[%s190 + $0xc0] sm:$0xff] %vm2445, %v2182
      %2471 = vst.msk [vmem:[%s190 + $0xc8] sm:$0xff] %vm2445, %v2185
      %2472 = vst.msk [vmem:[%s190 + $0xd0] sm:$0xff] %vm2445, %v2188
      %2473 = vst.msk [vmem:[%s190 + $0xd8] sm:$0xff] %vm2445, %v2191
      %2474 = vst.msk [vmem:[%s190 + $0xe0] sm:$0xff] %vm2445, %v2194
      %2475 = vst.msk [vmem:[%s190 + $0xe8] sm:$0xff] %vm2445, %v2197
      %2476 = vst.msk [vmem:[%s190 + $0xf0] sm:$0xff] %vm2445, %v2200
      %2477 = vst.msk [vmem:[%s190 + $0xf8] sm:$0xff] %vm2445, %v2203
      %2478 = vst.msk [vmem:[%s190 + $0x100] sm:$0xff] %vm2445, %v2206
      %2479 = vst.msk [vmem:[%s190 + $0x108] sm:$0xff] %vm2445, %v2209
      %2480 = vst.msk [vmem:[%s190 + $0x110] sm:$0xff] %vm2445, %v2212
      %2481 = vst.msk [vmem:[%s190 + $0x118] sm:$0xff] %vm2445, %v2215
      %2482 = vst.msk [vmem:[%s190 + $0x120] sm:$0xff] %vm2445, %v2218
      %2483 = vst.msk [vmem:[%s190 + $0x128] sm:$0xff] %vm2445, %v2221
      %2484 = vst.msk [vmem:[%s190 + $0x130] sm:$0xff] %vm2445, %v2224
      %2485 = vst.msk [vmem:[%s190 + $0x138] sm:$0xff] %vm2445, %v2227
      %2486 = vst.msk [vmem:[%s190 + $0x140] sm:$0xff] %vm2445, %v2230
      %2487 = vst.msk [vmem:[%s190 + $0x148] sm:$0xff] %vm2445, %v2233
      %2488 = vst.msk [vmem:[%s190 + $0x150] sm:$0xff] %vm2445, %v2236
      %2489 = vst.msk [vmem:[%s190 + $0x158] sm:$0xff] %vm2445, %v2239
      %2490 = vst.msk [vmem:[%s190 + $0x160] sm:$0xff] %vm2445, %v2242
      %2491 = vst.msk [vmem:[%s190 + $0x168] sm:$0xff] %vm2445, %v2245
      %2492 = vst.msk [vmem:[%s190 + $0x170] sm:$0xff] %vm2445, %v2248
      %2493 = vst.msk [vmem:[%s190 + $0x178] sm:$0xff] %vm2445, %v2251
      %2494 = vst.msk [vmem:[%s190 + $0x180] sm:$0xff] %vm2445, %v2254
      %2495 = vst.msk [vmem:[%s190 + $0x188] sm:$0xff] %vm2445, %v2257
      %2496 = vst.msk [vmem:[%s190 + $0x190] sm:$0xff] %vm2445, %v2260
      %2497 = vst.msk [vmem:[%s190 + $0x198] sm:$0xff] %vm2445, %v2263
      %2498 = vst.msk [vmem:[%s190 + $0x1a0] sm:$0xff] %vm2445, %v2266
      %2499 = vst.msk [vmem:[%s190 + $0x1a8] sm:$0xff] %vm2445, %v2269
      %2500 = vst.msk [vmem:[%s190 + $0x1b0] sm:$0xff] %vm2445, %v2272
      %2501 = vst.msk [vmem:[%s190 + $0x1b8] sm:$0xff] %vm2445, %v2275
      %2502 = vst.msk [vmem:[%s190 + $0x1c0] sm:$0xff] %vm2445, %v2278
      %2503 = vst.msk [vmem:[%s190 + $0x1c8] sm:$0xff] %vm2445, %v2281
      %2504 = vst.msk [vmem:[%s190 + $0x1d0] sm:$0xff] %vm2445, %v2284
      %2505 = vst.msk [vmem:[%s190 + $0x1d8] sm:$0xff] %vm2445, %v2287
      %2506 = vst.msk [vmem:[%s190 + $0x1e0] sm:$0xff] %vm2445, %v2290
      %2507 = vst.msk [vmem:[%s190 + $0x1e8] sm:$0xff] %vm2445, %v2293
      %2508 = vst.msk [vmem:[%s190 + $0x1f0] sm:$0xff] %vm2445, %v2296
      %2509 = vst.msk [vmem:[%s190 + $0x1f8] sm:$0xff] %vm2445, %v2299
      %2510 = vst.msk [vmem:[%s190 + $0x200] sm:$0xff] %vm2445, %v2302
      %2511 = vst.msk [vmem:[%s190 + $0x208] sm:$0xff] %vm2445, %v2305
      %2512 = vst.msk [vmem:[%s190 + $0x210] sm:$0xff] %vm2445, %v2308
      %2513 = vst.msk [vmem:[%s190 + $0x218] sm:$0xff] %vm2445, %v2311
      %2514 = vst.msk [vmem:[%s190 + $0x220] sm:$0xff] %vm2445, %v2314
      %2515 = vst.msk [vmem:[%s190 + $0x228] sm:$0xff] %vm2445, %v2317
      %2516 = vst.msk [vmem:[%s190 + $0x230] sm:$0xff] %vm2445, %v2320
      %2517 = vst.msk [vmem:[%s190 + $0x238] sm:$0xff] %vm2445, %v2323
      %2518 = vst.msk [vmem:[%s190 + $0x240] sm:$0xff] %vm2445, %v2326
      %2519 = vst.msk [vmem:[%s190 + $0x248] sm:$0xff] %vm2445, %v2329
      %2520 = vst.msk [vmem:[%s190 + $0x250] sm:$0xff] %vm2445, %v2332
      %2521 = vst.msk [vmem:[%s190 + $0x258] sm:$0xff] %vm2445, %v2335
      %2522 = vst.msk [vmem:[%s190 + $0x260] sm:$0xff] %vm2445, %v2338
      %2523 = vst.msk [vmem:[%s190 + $0x268] sm:$0xff] %vm2445, %v2341
      %2524 = vst.msk [vmem:[%s190 + $0x270] sm:$0xff] %vm2445, %v2344
      %2525 = vst.msk [vmem:[%s190 + $0x278] sm:$0xff] %vm2445, %v2347
      %2526 = vst.msk [vmem:[%s190 + $0x280] sm:$0xff] %vm2445, %v2350
      %2527 = vst.msk [vmem:[%s190 + $0x288] sm:$0xff] %vm2445, %v2353
      %2528 = vst.msk [vmem:[%s190 + $0x290] sm:$0xff] %vm2445, %v2356
      %2529 = vst.msk [vmem:[%s190 + $0x298] sm:$0xff] %vm2445, %v2359
      %2530 = vst.msk [vmem:[%s190 + $0x2a0] sm:$0xff] %vm2445, %v2362
      %2531 = vst.msk [vmem:[%s190 + $0x2a8] sm:$0xff] %vm2445, %v2365
      %2532 = vst.msk [vmem:[%s190 + $0x2b0] sm:$0xff] %vm2445, %v2368
      %2533 = vst.msk [vmem:[%s190 + $0x2b8] sm:$0xff] %vm2445, %v2371
      %2534 = vst.msk [vmem:[%s190 + $0x2c0] sm:$0xff] %vm2445, %v2374
      %2535 = vst.msk [vmem:[%s190 + $0x2c8] sm:$0xff] %vm2445, %v2377
      %2536 = vst.msk [vmem:[%s190 + $0x2d0] sm:$0xff] %vm2445, %v2380
      %2537 = vst.msk [vmem:[%s190 + $0x2d8] sm:$0xff] %vm2445, %v2383
      %2538 = vst.msk [vmem:[%s190 + $0x2e0] sm:$0xff] %vm2445, %v2386
      %2539 = vst.msk [vmem:[%s190 + $0x2e8] sm:$0xff] %vm2445, %v2389
      %2540 = vst.msk [vmem:[%s190 + $0x2f0] sm:$0xff] %vm2445, %v2392
      %2541 = vst.msk [vmem:[%s190 + $0x2f8] sm:$0xff] %vm2445, %v2395
      %2542 = vst.msk [vmem:[%s190 + $0x300] sm:$0xff] %vm2445, %v2398
      %2543 = vst.msk [vmem:[%s190 + $0x308] sm:$0xff] %vm2445, %v2401
      %2544 = vst.msk [vmem:[%s190 + $0x310] sm:$0xff] %vm2445, %v2404
      %2545 = vst.msk [vmem:[%s190 + $0x318] sm:$0xff] %vm2445, %v2407
      %2546 = vst.msk [vmem:[%s190 + $0x320] sm:$0xff] %vm2445, %v2410
      %2547 = vst.msk [vmem:[%s190 + $0x328] sm:$0xff] %vm2445, %v2413
      %2548 = vst.msk [vmem:[%s190 + $0x330] sm:$0xff] %vm2445, %v2416
      %2549 = vst.msk [vmem:[%s190 + $0x338] sm:$0xff] %vm2445, %v2419
      %2550 = vst.msk [vmem:[%s190 + $0x340] sm:$0xff] %vm2445, %v2422
      %2551 = vst.msk [vmem:[%s190 + $0x348] sm:$0xff] %vm2445, %v2425
      %2552 = vst.msk [vmem:[%s190 + $0x350] sm:$0xff] %vm2445, %v2428
      %2553 = vst.msk [vmem:[%s190 + $0x358] sm:$0xff] %vm2445, %v2431
      %2554 = vst.msk [vmem:[%s190 + $0x360] sm:$0xff] %vm2445, %v2434
      %2555 = vst.msk [vmem:[%s190 + $0x368] sm:$0xff] %vm2445, %v2437
      %2556 = vst.msk [vmem:[%s190 + $0x370] sm:$0xff] %vm2445, %v2440
      %2557 = vst.msk [vmem:[%s190 + $0x378] sm:$0xff] %vm2445, %v2443
      %s2558 = smul.u32 112, %s18
      %p2559 = scmp.lt.s32.totalorder %s17, 0
      %s2560 = scalar_select %p2559, %s17, 0
      %p2561 = scmp.lt.s32.totalorder %s2558, 223
      %s2562 = scalar_select %p2561, %s2558, 223
      %s2563 = smul.addr %s2560, 224
      %s2564 = sadd.s32 %s2562, %s2563
      %s2565 = smul.addr %s2564, 8
      %s2566 = scalar_lea.vmem %s2, %s2565
      // Predicated region
      $region29: #{tpu_custom_call.1} parent=27 // pred_check
        %p2567 = pneg %p97
      $region30: #{tpu_custom_call.1} parent=27 // pred_check_branch
        %2569 = sbr.rel (%p2567) target = $region32
      $region31: #{tpu_custom_call.1} parent=27 // pred_region
        %s2570 = smul.u32 112, %s18
      $region32: #{tpu_custom_call.1} parent=27 // pred_fallthru
        _
    $region28: #{tpu_custom_call.1} parent=5 // pred_fallthru
      _
    %p2571 = scmp.le.s32.totalorder 2, %s8
    // Predicated region
    $region33: #{tpu_custom_call.1} parent=5 // pred_check
      %p2572 = pneg %p2571
    $region34: #{tpu_custom_call.1} parent=5 // pred_check_branch
      %2574 = sbr.rel (%p2572) target = $region36
    $region35: #{tpu_custom_call.1} parent=5 // pred_region
      %s2575 = ssub.s32 %s8, 2
      // Predicated region
      $region37: #{tpu_custom_call.1} parent=35 // pred_check
        %p2576 = pneg %p103
      $region38: #{tpu_custom_call.1} parent=35 // pred_check_branch
        %2578 = sbr.rel (%p2576) target = $region40
      $region39: #{tpu_custom_call.1} parent=35 // pred_region
        %s2579 = smul.u32 112, %s20
        %p2580 = scmp.lt.s32.totalorder %s19, 0
        %s2581 = scalar_select %p2580, %s19, 0
        %p2582 = scmp.lt.s32.totalorder %s2579, 223
        %s2583 = scalar_select %p2582, %s2579, 223
        %s2584 = smul.addr %s2581, 224
        %s2585 = sadd.s32 %s2583, %s2584
        %s2586 = smul.addr %s2585, 8
        %s2587 = scalar_lea.vmem %s2, %s2586
      $region40: #{tpu_custom_call.1} parent=35 // pred_fallthru
        _
    $region36: #{tpu_custom_call.1} parent=5 // pred_fallthru
      _
  $region6: #{tpu_custom_call.1} parent=0 // loop_footer
    %s12 = sadd.s32 1, %s8
  $region7: #{tpu_custom_call.1} parent=0 // loop_footer_branch
    %7 = sbr.rel target = $region3
  $region8: #{tpu_custom_call.1} parent=0 // loop_exit
    _

</llo_original>
